<compile_context>
chip_gen: v6e
topology: v6e:2x2x1
jax: 0.10.0
libtpu: 0.0.40
codegen_flags: <defaults>
</compile_context>

<pallas_src>
from typing import List, Union

import jax
import jax.numpy as jnp
from jax.experimental import pallas as pl
from jax.experimental.pallas import tpu as pltpu


# Sublane packing per input itemsize (32-bit: 8 rows/vreg, 16-bit: 16, 8-bit: 32).
_SUBLANE_FOR_ITEMSIZE = {4: 8, 2: 16, 1: 32}

_MAX_BLOCK_ROWS = 4096                  # ~2 MiB per f32 (rows, 9) block after 128-lane padding
_VMEM_BUDGET_BYTES = 12 * 1024 * 1024   # in+out, double-buffered; < v5e 16 MiB scoped default
_PALLAS_MIN_ELEMS = 512 * 1024          # below ~2 MiB, let XLA fuse the convert instead


def _cast_to_int_kernel(x_ref, o_ref):
    # Elementwise cast; float -> int32 truncates toward zero, matching
    # torch.Tensor.to(torch.int) for in-range values.
    # TODO(synk): NaN/Inf/out-of-range float behavior is implementation-defined
    # on TPU and may differ from PyTorch; clamp upstream if dates can be garbage.
    o_ref[...] = x_ref[...].astype(jnp.int32)


def _round_up(x: int, m: int) -> int:
    return ((x + m - 1) // m) * m


def _padded_row_bytes(trailing, itemsize: int, sublane: int) -> int:
    """VMEM bytes of one leading-axis 'row' after (sublane, 128) tile padding."""
    if len(trailing) == 0:
        return _round_up(1, 128) * itemsize
    if len(trailing) == 1:
        return _round_up(trailing[0], 128) * itemsize
    lead = 1
    for d in trailing[:-2]:
        lead *= d
    return lead * _round_up(trailing[-2], sublane) * _round_up(trailing[-1], 128) * itemsize


def date_preprocessing(
    v: Union[jnp.ndarray, List[jnp.ndarray]],
    *,
    min_pallas_elems: int = _PALLAS_MIN_ELEMS,
) -> jnp.ndarray:
    """JAX/Pallas equivalent of _DatePreprocessing.forward."""
    if isinstance(v, (list, tuple)):
        v = jnp.stack(list(v))  # glue: torch.stack equivalent
    if not isinstance(v, jnp.ndarray):
        raise ValueError(f"Unsupported input: {v}")

    # Already the target dtype: nothing to do.
    if v.dtype == jnp.int32:
        return v

    n = int(v.size)
    # Fast path: tiny inputs (the common small [batch, 9] date tensor) and
    # rank-0/1 inputs -- XLA fuses the convert into the consumer for free, and
    # a pallas_call launch would cost more than the cast itself.
    if n == 0 or n < min_pallas_elems or v.ndim < 2:
        return v.astype(jnp.int32)

    # --- Pallas path: tile the leading (batch) axis, native layout ----------
    rows = v.shape[0]
    trailing = v.shape[1:]
    itemsize = v.dtype.itemsize
    sublane = _SUBLANE_FOR_ITEMSIZE.get(itemsize, 8)

    # Per-row VMEM footprint for input block + int32 output block.
    row_bytes = _padded_row_bytes(trailing, itemsize, sublane) + \
                _padded_row_bytes(trailing, 4, 8)
    cap = _VMEM_BUDGET_BYTES // (2 * row_bytes)          # /2: double-buffered
    cap = max(sublane, min(_MAX_BLOCK_ROWS, cap))

    if rows <= cap:
        # Single full-extent block (block dim == full array dim is always legal).
        block_rows = rows
    else:
        block_rows = max(sublane, (cap // sublane) * sublane)
        n_blocks = -(-rows // block_rows)
        if n_blocks % 2 == 1:
            # v7x: two TensorCores share the "parallel" axis; prefer an even
            # split so neither core sits ~idle on the last block.
            block_rows = max(sublane, _round_up(-(-rows // (n_blocks + 1)), sublane))
    n_blocks = pl.cdiv(rows, block_rows)

    block_shape = (block_rows,) + tuple(trailing)
    ndim = v.ndim
    index_map = lambda i: (i,) + (0,) * (ndim - 1)

    return pl.pallas_call(
        _cast_to_int_kernel,
        out_shape=jax.ShapeDtypeStruct(v.shape, jnp.int32),
        grid=(n_blocks,),
        in_specs=[pl.BlockSpec(block_shape, index_map)],
        out_specs=pl.BlockSpec(block_shape, index_map),
        compiler_params=pltpu.CompilerParams(
            dimension_semantics=("parallel",),  # shard row axis across v7x's 2 TCs
        ),
    )(v)


if __name__ == "__main__":
    key = jax.random.PRNGKey(0)
    date_vector_length = 9  # Ludwig DATE_VECTOR_LENGTH
    k1, k2, k3 = jax.random.split(key, 3)

    # Case 1: float (batch, 9) date tensor, forced onto the Pallas path.
    # batch=10000 exercises the interesting tiling logic at a modest size:
    # cap=4096 rows -> 3 blocks (odd) -> re-split into 4 blocks of 2504 rows
    # with a ragged (masked) 2488-row boundary block, no padding or output
    # slicing anywhere.
    batch_1 = 10000
    x1 = jax.random.uniform(
        k1, (batch_1, date_vector_length), minval=-100.0, maxval=2023.0,
        dtype=jnp.float32,
    )
    out1 = jax.block_until_ready(date_preprocessing(x1, min_pallas_elems=0))
    assert out1.shape == (batch_1, date_vector_length)
    assert out1.dtype == jnp.int32
    assert jnp.array_equal(out1, x1.astype(jnp.int32))

    # Case 2: small list of per-sample date vectors (torch.stack path; tiny
    # input takes the fused-XLA fast path on purpose).
    batch_2 = 8
    rows = [
        jax.random.uniform(
            k, (date_vector_length,), minval=0.0, maxval=60.0, dtype=jnp.float32,
        )
        for k in jax.random.split(k2, batch_2)
    ]
    out2 = jax.block_until_ready(date_preprocessing(rows))
    assert out2.shape == (batch_2, date_vector_length)
    assert out2.dtype == jnp.int32
    assert jnp.array_equal(out2, jnp.stack(rows).astype(jnp.int32))

    # Case 3: already-int32 input is returned unchanged (dtype short circuit).
    x3 = jax.random.randint(
        k3, (batch_2, date_vector_length), 0, 2023, dtype=jnp.int32,
    )
    out3 = jax.block_until_ready(date_preprocessing(x3))
    assert out3.dtype == jnp.int32
    assert jnp.array_equal(out3, x3)

    print("KERNEL_OK")
</pallas_src>

<mosaic_0001>
module attributes {stable_mosaic.version = 11 : i64} {
  func.func @_cast_to_int_kernel(%arg0: i32, %arg1: memref<2504x9xf32, #tpu.memory_space<vmem>>, %arg2: memref<2504x9xi32, #tpu.memory_space<vmem>>) attributes {dimension_semantics = [#tpu.dimension_semantics<parallel>], iteration_bounds = array<i64: 4>, scalar_prefetch = 0 : i64, scratch_operands = 0 : i64, tpu.core_type = #tpu.core_type<tc>, window_params = [{transform_indices = @transform_0, window_bounds = array<i64: 2504, 9>}, {transform_indices = @transform_1, window_bounds = array<i64: 2504, 9>}]} {
    %c0 = arith.constant 0 : index
    %c0_0 = arith.constant 0 : index
    %0 = vector.load %arg1[%c0, %c0_0] : memref<2504x9xf32, #tpu.memory_space<vmem>>, vector<2504x9xf32>
    %1 = arith.fptosi %0 : vector<2504x9xf32> to vector<2504x9xi32>
    %c0_1 = arith.constant 0 : index
    %c0_2 = arith.constant 0 : index
    %2 = vector.load %arg2[%c0_1, %c0_2] : memref<2504x9xi32, #tpu.memory_space<vmem>>, vector<2504x9xi32>
    tpu.vector_store %arg2[%c0_1, %c0_2], %1 {strides = array<i32>} : memref<2504x9xi32, #tpu.memory_space<vmem>>, vector<2504x9xi32>,
    return
  }
  func.func @transform_0(%arg0: i32) -> (i32, i32) {
    %c0_i32 = arith.constant 0 : i32
    %c0_i32_0 = arith.constant 0 : i32
    return %arg0, %c0_i32 : i32, i32
  }
  func.func @transform_1(%arg0: i32) -> (i32, i32) {
    %c0_i32 = arith.constant 0 : i32
    %c0_i32_0 = arith.constant 0 : i32
    return %arg0, %c0_i32 : i32, i32
  }
}

</mosaic_0001>

<llo_original>
// kernel: tpu_custom_call.1
$region0: #{tpu_custom_call.1}
  #allocation0 [shape = 'u32[]', space=smem, size = 0x4, offset = 0x4, fixed_abs, tag = 'smem constant byte address 0x4 - core index']
  #allocation1 [shape = 'u32[144,128]{1,0:T(1,128)}', space=vmem, size = 0x12000, scoped, tag = 'internal scratch']
  %s0 = inlined_call_operand.vmem [shape: f32[10000,9], index: 0, kind: input, shape index: {}]
  %s1 = inlined_call_operand.vmem [shape: s32[10000,9], index: 1, kind: output, shape index: {}]
  %s2 = sld [smem:[#allocation0]]
  $region85: #{tpu_custom_call.1} parent=0
    _
  %s4 = ssub.s32 1, %s2
  %s5 = scalar_select 0, %s4, %s2
  $region1: #{tpu_custom_call.1} parent=0
    #allocation2 [shape = 'u8[2564096]{0}', space=vmem, size = 0x272000, scoped, tag = 'output window, operand 0']
    loop: start=0, step=1, limit=6
    $region2: #{tpu_custom_call.1} parent=1 // loop_pre_header
      _
    $region3: #{tpu_custom_call.1} parent=1 // loop_header
      %s7 = sphi 0, %s11
      %p8 = scmp.ge.s32.totalorder %s7, 6
      %s17 = sphi 0, %s19
      %s20 = sphi 0, %s17
      %s21 = sphi 0, %s20
      %s37 = sphi 0, %s21
      %s43 = sphi 0, %s45
      %s46 = sphi 0, %s43
      %s47 = sphi 0, %s46
      %s63 = sphi 0, %s47
    $region4: #{tpu_custom_call.1} parent=1 // loop_header_branch
      %10 = sbr.rel (%p8) target = $region8
    $region5: #{tpu_custom_call.1} parent=1 // loop_body
      %s12 = ssub.s32 %s7, 1
      %s13 = ssub.s32 %s7, 2
      %s14 = sadd.s32 %s7, 1
      %s15 = ssub.s32 %s7, %s14
      %p16 = scmp.eq.s32.totalorder %s15, 0
      %s18 = sadd.s32 %s17, 1
      %s19 = scalar_select %p16, %s17, %s18
      %p22 = pneg %p16
      %p23 = scmp.eq.s32.totalorder %s7, 3
      %p24 = por %p22, %p23
      %p25 = scmp.ne.s32.totalorder %s17, %s20
      %p26 = scmp.eq.s32.totalorder %s7, 0
      %p27 = por %p25, %p26
      %p28 = scmp.ne.s32.totalorder %s17, %s20
      %p29 = scmp.eq.s32.totalorder %s12, 3
      %p30 = por %p28, %p29
      %p31 = scmp.ne.s32.totalorder %s20, %s21
      %p32 = scmp.eq.s32.totalorder %s12, 0
      %p33 = por %p31, %p32
      %p34 = scmp.ne.s32.totalorder %s20, %s21
      %p35 = scmp.eq.s32.totalorder %s13, 3
      %p36 = por %p34, %p35
      %p38 = scmp.ne.s32.totalorder %s21, %s37
      %p39 = scmp.eq.s32.totalorder %s13, 0
      %p40 = por %p38, %p39
      %s41 = ssub.s32 %s7, %s14
      %p42 = scmp.eq.s32.totalorder %s41, 0
      %s44 = sadd.s32 %s43, 1
      %s45 = scalar_select %p42, %s43, %s44
      %p48 = pneg %p42
      %p49 = scmp.eq.s32.totalorder %s7, 3
      %p50 = por %p48, %p49
      %p51 = scmp.ne.s32.totalorder %s43, %s46
      %p52 = scmp.eq.s32.totalorder %s7, 0
      %p53 = por %p51, %p52
      %p54 = scmp.ne.s32.totalorder %s43, %s46
      %p55 = scmp.eq.s32.totalorder %s12, 3
      %p56 = por %p54, %p55
      %p57 = scmp.ne.s32.totalorder %s46, %s47
      %p58 = scmp.eq.s32.totalorder %s12, 0
      %p59 = por %p57, %p58
      %p60 = scmp.ne.s32.totalorder %s46, %s47
      %p61 = scmp.eq.s32.totalorder %s13, 3
      %p62 = por %p60, %p61
      %p64 = scmp.ne.s32.totalorder %s47, %s63
      %p65 = scmp.eq.s32.totalorder %s13, 0
      %p66 = por %p64, %p65
      %p67 = scmp.le.s32.totalorder 1, %s7
      %p68 = scmp.lt.s32.totalorder %s7, 5
      %p69 = pnand %p67, %p68
      %p70 = pneg %p69
      // Predicated region
      $region9: #{tpu_custom_call.1} parent=5 // pred_check
        _
      $region10: #{tpu_custom_call.1} parent=5 // pred_check_branch
        %72 = sbr.rel (%p69) target = $region12
      $region11: #{tpu_custom_call.1} parent=5 // pred_region
        %s73 = ssub.s32 %s7, 1
      $region12: #{tpu_custom_call.1} parent=5 // pred_fallthru
        _
      %p74 = scmp.lt.s32.totalorder %s7, 4
      // Predicated region
      $region13: #{tpu_custom_call.1} parent=5 // pred_check
        %p75 = pneg %p74
      $region14: #{tpu_custom_call.1} parent=5 // pred_check_branch
        %77 = sbr.rel (%p75) target = $region16
      $region15: #{tpu_custom_call.1} parent=5 // pred_region
        // Predicated region
        $region17: #{tpu_custom_call.1} parent=15 // pred_check
          %p78 = pneg %p27
        $region18: #{tpu_custom_call.1} parent=15 // pred_check_branch
          %80 = sbr.rel (%p78) target = $region20
        $region19: #{tpu_custom_call.1} parent=15 // pred_region
          %s81 = smul.u32 313, %s7
          %s82 = ssub.s32 1250, %s81
          %p83 = scmp.lt.s32.totalorder %s82, 313
          %s84 = scalar_select %p83, %s82, 313
          %s85 = smul.u32 128, %s84
          %p86 = scmp.lt.s32.totalorder %s81, 1249
          %s87 = scalar_select %p86, %s81, 1249
          %s88 = smul.addr %s87, 8
          %s89 = scalar_lea.vmem %s0, %s88
          %s90 = smul.u32 313, %s7
          %s91 = ssub.s32 1250, %s90
          %p92 = scmp.lt.s32.totalorder %s91, 313
          %s93 = scalar_select %p92, %s91, 313
          %s94 = smul.u32 128, %s93
        $region20: #{tpu_custom_call.1} parent=15 // pred_fallthru
          _
      $region16: #{tpu_custom_call.1} parent=5 // pred_fallthru
        _
      %p95 = scmp.le.s32.totalorder 1, %s7
      %p96 = scmp.lt.s32.totalorder %s7, 5
      %p97 = pnand %p95, %p96
      %p98 = pneg %p97
      // Predicated region
      $region21: #{tpu_custom_call.1} parent=5 // pred_check
        _
      $region22: #{tpu_custom_call.1} parent=5 // pred_check_branch
        %100 = sbr.rel (%p97) target = $region24
      $region23: #{tpu_custom_call.1} parent=5 // pred_region
        %s101 = ssub.s32 %s7, 1
        %s102 = smul.u32 313, %s12
        %s103 = ssub.s32 1250, %s102
        %p104 = scmp.lt.s32.totalorder %s103, 313
        %s105 = scalar_select %p104, %s103, 313
        %s106 = smul.u32 128, %s105
        %p107 = scmp.lt.s32.totalorder %s102, 1249
        %s108 = scalar_select %p107, %s102, 1249
        %s109 = smul.addr %s108, 8
        %s110 = scalar_lea.vmem %s0, %s109
        %p111 = pneg %p33
        %p112 = pneg %p30
        %p113 = pneg %p59
        %p114 = pneg %p56
        %s115 = sand.u32 %s46, 1
        %s116 = sand.u32 %s46, 1
        %s117 = smul.addr %s116, 2504
        %s118 = scalar_lea.vmem [#allocation2], %s117
        %s119 = smul.u32 313, %s12
        %s120 = ssub.s32 1250, %s119
        %p121 = scmp.lt.s32.totalorder %s120, 313
        %s122 = scalar_select %p121, %s120, 313
        %s123 = smul.u32 128, %s122
        %p124 = scmp.lt.s32.totalorder %s119, 1249
        %s125 = scalar_select %p124, %s119, 1249
        %s126 = smul.addr %s125, 8
        %s127 = scalar_lea.vmem %s0, %s126
        %s128 = smul.u32 313, %s12
        %s129 = ssub.s32 1250, %s128
        %p130 = scmp.lt.s32.totalorder %s129, 313
        %s131 = scalar_select %p130, %s129, 313
        %s132 = smul.u32 128, %s131
        %s133 = smul.u32 313, %s12
        %s134 = ssub.s32 1250, %s133
        %p135 = scmp.lt.s32.totalorder %s134, 313
        %s136 = scalar_select %p135, %s134, 313
        %s137 = smul.u32 128, %s136
        %v138 = vld [vmem:[%s127] sm:$0xff]
        %v139 = vld [vmem:[%s127 + $0x8] sm:$0xff]
        %v140 = vld [vmem:[%s127 + $0x10] sm:$0xff]
        %v141 = vld [vmem:[%s127 + $0x18] sm:$0xff]
        %v142 = vld [vmem:[%s127 + $0x20] sm:$0xff]
        %v143 = vld [vmem:[%s127 + $0x28] sm:$0xff]
        %v144 = vld [vmem:[%s127 + $0x30] sm:$0xff]
        %v145 = vld [vmem:[%s127 + $0x38] sm:$0xff]
        %v146 = vld [vmem:[%s127 + $0x40] sm:$0xff]
        %v147 = vld [vmem:[%s127 + $0x48] sm:$0xff]
        %v148 = vld [vmem:[%s127 + $0x50] sm:$0xff]
        %v149 = vld [vmem:[%s127 + $0x58] sm:$0xff]
        %v150 = vld [vmem:[%s127 + $0x60] sm:$0xff]
        %v151 = vld [vmem:[%s127 + $0x68] sm:$0xff]
        %v152 = vld [vmem:[%s127 + $0x70] sm:$0xff]
        %v153 = vld [vmem:[%s127 + $0x78] sm:$0xff]
        %v154 = vld [vmem:[%s127 + $0x80] sm:$0xff]
        %v155 = vld [vmem:[%s127 + $0x88] sm:$0xff]
        %v156 = vld [vmem:[%s127 + $0x90] sm:$0xff]
        %v157 = vld [vmem:[%s127 + $0x98] sm:$0xff]
        %v158 = vld [vmem:[%s127 + $0xa0] sm:$0xff]
        %v159 = vld [vmem:[%s127 + $0xa8] sm:$0xff]
        %v160 = vld [vmem:[%s127 + $0xb0] sm:$0xff]
        %v161 = vld [vmem:[%s127 + $0xb8] sm:$0xff]
        %v162 = vld [vmem:[%s127 + $0xc0] sm:$0xff]
        %v163 = vld [vmem:[%s127 + $0xc8] sm:$0xff]
        %v164 = vld [vmem:[%s127 + $0xd0] sm:$0xff]
        %v165 = vld [vmem:[%s127 + $0xd8] sm:$0xff]
        %v166 = vld [vmem:[%s127 + $0xe0] sm:$0xff]
        %v167 = vld [vmem:[%s127 + $0xe8] sm:$0xff]
        %v168 = vld [vmem:[%s127 + $0xf0] sm:$0xff]
        %v169 = vld [vmem:[%s127 + $0xf8] sm:$0xff]
        %v170 = vld [vmem:[%s127 + $0x100] sm:$0xff]
        %v171 = vld [vmem:[%s127 + $0x108] sm:$0xff]
        %v172 = vld [vmem:[%s127 + $0x110] sm:$0xff]
        %v173 = vld [vmem:[%s127 + $0x118] sm:$0xff]
        %v174 = vld [vmem:[%s127 + $0x120] sm:$0xff]
        %v175 = vld [vmem:[%s127 + $0x128] sm:$0xff]
        %v176 = vld [vmem:[%s127 + $0x130] sm:$0xff]
        %v177 = vld [vmem:[%s127 + $0x138] sm:$0xff]
        %v178 = vld [vmem:[%s127 + $0x140] sm:$0xff]
        %v179 = vld [vmem:[%s127 + $0x148] sm:$0xff]
        %v180 = vld [vmem:[%s127 + $0x150] sm:$0xff]
        %v181 = vld [vmem:[%s127 + $0x158] sm:$0xff]
        %v182 = vld [vmem:[%s127 + $0x160] sm:$0xff]
        %v183 = vld [vmem:[%s127 + $0x168] sm:$0xff]
        %v184 = vld [vmem:[%s127 + $0x170] sm:$0xff]
        %v185 = vld [vmem:[%s127 + $0x178] sm:$0xff]
        %v186 = vld [vmem:[%s127 + $0x180] sm:$0xff]
        %v187 = vld [vmem:[%s127 + $0x188] sm:$0xff]
        %v188 = vld [vmem:[%s127 + $0x190] sm:$0xff]
        %v189 = vld [vmem:[%s127 + $0x198] sm:$0xff]
        %v190 = vld [vmem:[%s127 + $0x1a0] sm:$0xff]
        %v191 = vld [vmem:[%s127 + $0x1a8] sm:$0xff]
        %v192 = vld [vmem:[%s127 + $0x1b0] sm:$0xff]
        %v193 = vld [vmem:[%s127 + $0x1b8] sm:$0xff]
        %v194 = vld [vmem:[%s127 + $0x1c0] sm:$0xff]
        %v195 = vld [vmem:[%s127 + $0x1c8] sm:$0xff]
        %v196 = vld [vmem:[%s127 + $0x1d0] sm:$0xff]
        %v197 = vld [vmem:[%s127 + $0x1d8] sm:$0xff]
        %v198 = vld [vmem:[%s127 + $0x1e0] sm:$0xff]
        %v199 = vld [vmem:[%s127 + $0x1e8] sm:$0xff]
        %v200 = vld [vmem:[%s127 + $0x1f0] sm:$0xff]
        %v201 = vld [vmem:[%s127 + $0x1f8] sm:$0xff]
        %v202 = vld [vmem:[%s127 + $0x200] sm:$0xff]
        %v203 = vld [vmem:[%s127 + $0x208] sm:$0xff]
        %v204 = vld [vmem:[%s127 + $0x210] sm:$0xff]
        %v205 = vld [vmem:[%s127 + $0x218] sm:$0xff]
        %v206 = vld [vmem:[%s127 + $0x220] sm:$0xff]
        %v207 = vld [vmem:[%s127 + $0x228] sm:$0xff]
        %v208 = vld [vmem:[%s127 + $0x230] sm:$0xff]
        %v209 = vld [vmem:[%s127 + $0x238] sm:$0xff]
        %v210 = vld [vmem:[%s127 + $0x240] sm:$0xff]
        %v211 = vld [vmem:[%s127 + $0x248] sm:$0xff]
        %v212 = vld [vmem:[%s127 + $0x250] sm:$0xff]
        %v213 = vld [vmem:[%s127 + $0x258] sm:$0xff]
        %v214 = vld [vmem:[%s127 + $0x260] sm:$0xff]
        %v215 = vld [vmem:[%s127 + $0x268] sm:$0xff]
        %v216 = vld [vmem:[%s127 + $0x270] sm:$0xff]
        %v217 = vld [vmem:[%s127 + $0x278] sm:$0xff]
        %v218 = vld [vmem:[%s127 + $0x280] sm:$0xff]
        %v219 = vld [vmem:[%s127 + $0x288] sm:$0xff]
        %v220 = vld [vmem:[%s127 + $0x290] sm:$0xff]
        %v221 = vld [vmem:[%s127 + $0x298] sm:$0xff]
        %v222 = vld [vmem:[%s127 + $0x2a0] sm:$0xff]
        %v223 = vld [vmem:[%s127 + $0x2a8] sm:$0xff]
        %v224 = vld [vmem:[%s127 + $0x2b0] sm:$0xff]
        %v225 = vld [vmem:[%s127 + $0x2b8] sm:$0xff]
        %v226 = vld [vmem:[%s127 + $0x2c0] sm:$0xff]
        %v227 = vld [vmem:[%s127 + $0x2c8] sm:$0xff]
        %v228 = vld [vmem:[%s127 + $0x2d0] sm:$0xff]
        %v229 = vld [vmem:[%s127 + $0x2d8] sm:$0xff]
        %v230 = vld [vmem:[%s127 + $0x2e0] sm:$0xff]
        %v231 = vld [vmem:[%s127 + $0x2e8] sm:$0xff]
        %v232 = vld [vmem:[%s127 + $0x2f0] sm:$0xff]
        %v233 = vld [vmem:[%s127 + $0x2f8] sm:$0xff]
        %v234 = vld [vmem:[%s127 + $0x300] sm:$0xff]
        %v235 = vld [vmem:[%s127 + $0x308] sm:$0xff]
        %v236 = vld [vmem:[%s127 + $0x310] sm:$0xff]
        %v237 = vld [vmem:[%s127 + $0x318] sm:$0xff]
        %v238 = vld [vmem:[%s127 + $0x320] sm:$0xff]
        %v239 = vld [vmem:[%s127 + $0x328] sm:$0xff]
        %v240 = vld [vmem:[%s127 + $0x330] sm:$0xff]
        %v241 = vld [vmem:[%s127 + $0x338] sm:$0xff]
        %v242 = vld [vmem:[%s127 + $0x340] sm:$0xff]
        %v243 = vld [vmem:[%s127 + $0x348] sm:$0xff]
        %v244 = vld [vmem:[%s127 + $0x350] sm:$0xff]
        %v245 = vld [vmem:[%s127 + $0x358] sm:$0xff]
        %v246 = vld [vmem:[%s127 + $0x360] sm:$0xff]
        %v247 = vld [vmem:[%s127 + $0x368] sm:$0xff]
        %v248 = vld [vmem:[%s127 + $0x370] sm:$0xff]
        %v249 = vld [vmem:[%s127 + $0x378] sm:$0xff]
        %v250 = vld [vmem:[%s127 + $0x380] sm:$0xff]
        %v251 = vld [vmem:[%s127 + $0x388] sm:$0xff]
        %v252 = vld [vmem:[%s127 + $0x390] sm:$0xff]
        %v253 = vld [vmem:[%s127 + $0x398] sm:$0xff]
        %v254 = vld [vmem:[%s127 + $0x3a0] sm:$0xff]
        %v255 = vld [vmem:[%s127 + $0x3a8] sm:$0xff]
        %v256 = vld [vmem:[%s127 + $0x3b0] sm:$0xff]
        %v257 = vld [vmem:[%s127 + $0x3b8] sm:$0xff]
        %v258 = vld [vmem:[%s127 + $0x3c0] sm:$0xff]
        %v259 = vld [vmem:[%s127 + $0x3c8] sm:$0xff]
        %v260 = vld [vmem:[%s127 + $0x3d0] sm:$0xff]
        %v261 = vld [vmem:[%s127 + $0x3d8] sm:$0xff]
        %v262 = vld [vmem:[%s127 + $0x3e0] sm:$0xff]
        %v263 = vld [vmem:[%s127 + $0x3e8] sm:$0xff]
        %v264 = vld [vmem:[%s127 + $0x3f0] sm:$0xff]
        %v265 = vld [vmem:[%s127 + $0x3f8] sm:$0xff]
        %v266 = vld [vmem:[%s127 + $0x400] sm:$0xff]
        %v267 = vld [vmem:[%s127 + $0x408] sm:$0xff]
        %v268 = vld [vmem:[%s127 + $0x410] sm:$0xff]
        %v269 = vld [vmem:[%s127 + $0x418] sm:$0xff]
        %v270 = vld [vmem:[%s127 + $0x420] sm:$0xff]
        %v271 = vld [vmem:[%s127 + $0x428] sm:$0xff]
        %v272 = vld [vmem:[%s127 + $0x430] sm:$0xff]
        %v273 = vld [vmem:[%s127 + $0x438] sm:$0xff]
        %v274 = vld [vmem:[%s127 + $0x440] sm:$0xff]
        %v275 = vld [vmem:[%s127 + $0x448] sm:$0xff]
        %v276 = vld [vmem:[%s127 + $0x450] sm:$0xff]
        %v277 = vld [vmem:[%s127 + $0x458] sm:$0xff]
        %v278 = vld [vmem:[%s127 + $0x460] sm:$0xff]
        %v279 = vld [vmem:[%s127 + $0x468] sm:$0xff]
        %v280 = vld [vmem:[%s127 + $0x470] sm:$0xff]
        %v281 = vld [vmem:[%s127 + $0x478] sm:$0xff]
        %v282 = vld [vmem:[%s127 + $0x480] sm:$0xff]
        %v283 = vld [vmem:[%s127 + $0x488] sm:$0xff]
        %v284 = vld [vmem:[%s127 + $0x490] sm:$0xff]
        %v285 = vld [vmem:[%s127 + $0x498] sm:$0xff]
        %v286 = vld [vmem:[%s127 + $0x4a0] sm:$0xff]
        %v287 = vld [vmem:[%s127 + $0x4a8] sm:$0xff]
        %v288 = vld [vmem:[%s127 + $0x4b0] sm:$0xff]
        %v289 = vld [vmem:[%s127 + $0x4b8] sm:$0xff]
        %v290 = vld [vmem:[%s127 + $0x4c0] sm:$0xff]
        %v291 = vld [vmem:[%s127 + $0x4c8] sm:$0xff]
        %v292 = vld [vmem:[%s127 + $0x4d0] sm:$0xff]
        %v293 = vld [vmem:[%s127 + $0x4d8] sm:$0xff]
        %v294 = vld [vmem:[%s127 + $0x4e0] sm:$0xff]
        %v295 = vld [vmem:[%s127 + $0x4e8] sm:$0xff]
        %v296 = vld [vmem:[%s127 + $0x4f0] sm:$0xff]
        %v297 = vld [vmem:[%s127 + $0x4f8] sm:$0xff]
        %v298 = vld [vmem:[%s127 + $0x500] sm:$0xff]
        %v299 = vld [vmem:[%s127 + $0x508] sm:$0xff]
        %v300 = vld [vmem:[%s127 + $0x510] sm:$0xff]
        %v301 = vld [vmem:[%s127 + $0x518] sm:$0xff]
        %v302 = vld [vmem:[%s127 + $0x520] sm:$0xff]
        %v303 = vld [vmem:[%s127 + $0x528] sm:$0xff]
        %v304 = vld [vmem:[%s127 + $0x530] sm:$0xff]
        %v305 = vld [vmem:[%s127 + $0x538] sm:$0xff]
        %v306 = vld [vmem:[%s127 + $0x540] sm:$0xff]
        %v307 = vld [vmem:[%s127 + $0x548] sm:$0xff]
        %v308 = vld [vmem:[%s127 + $0x550] sm:$0xff]
        %v309 = vld [vmem:[%s127 + $0x558] sm:$0xff]
        %v310 = vld [vmem:[%s127 + $0x560] sm:$0xff]
        %v311 = vld [vmem:[%s127 + $0x568] sm:$0xff]
        %v312 = vld [vmem:[%s127 + $0x570] sm:$0xff]
        %v313 = vld [vmem:[%s127 + $0x578] sm:$0xff]
        %v314 = vld [vmem:[%s127 + $0x580] sm:$0xff]
        %v315 = vld [vmem:[%s127 + $0x588] sm:$0xff]
        %v316 = vld [vmem:[%s127 + $0x590] sm:$0xff]
        %v317 = vld [vmem:[%s127 + $0x598] sm:$0xff]
        %v318 = vld [vmem:[%s127 + $0x5a0] sm:$0xff]
        %v319 = vld [vmem:[%s127 + $0x5a8] sm:$0xff]
        %v320 = vld [vmem:[%s127 + $0x5b0] sm:$0xff]
        %v321 = vld [vmem:[%s127 + $0x5b8] sm:$0xff]
        %v322 = vld [vmem:[%s127 + $0x5c0] sm:$0xff]
        %v323 = vld [vmem:[%s127 + $0x5c8] sm:$0xff]
        %v324 = vld [vmem:[%s127 + $0x5d0] sm:$0xff]
        %v325 = vld [vmem:[%s127 + $0x5d8] sm:$0xff]
        %v326 = vld [vmem:[%s127 + $0x5e0] sm:$0xff]
        %v327 = vld [vmem:[%s127 + $0x5e8] sm:$0xff]
        %v328 = vld [vmem:[%s127 + $0x5f0] sm:$0xff]
        %v329 = vld [vmem:[%s127 + $0x5f8] sm:$0xff]
        %v330 = vld [vmem:[%s127 + $0x600] sm:$0xff]
        %v331 = vld [vmem:[%s127 + $0x608] sm:$0xff]
        %v332 = vld [vmem:[%s127 + $0x610] sm:$0xff]
        %v333 = vld [vmem:[%s127 + $0x618] sm:$0xff]
        %v334 = vld [vmem:[%s127 + $0x620] sm:$0xff]
        %v335 = vld [vmem:[%s127 + $0x628] sm:$0xff]
        %v336 = vld [vmem:[%s127 + $0x630] sm:$0xff]
        %v337 = vld [vmem:[%s127 + $0x638] sm:$0xff]
        %v338 = vld [vmem:[%s127 + $0x640] sm:$0xff]
        %v339 = vld [vmem:[%s127 + $0x648] sm:$0xff]
        %v340 = vld [vmem:[%s127 + $0x650] sm:$0xff]
        %v341 = vld [vmem:[%s127 + $0x658] sm:$0xff]
        %v342 = vld [vmem:[%s127 + $0x660] sm:$0xff]
        %v343 = vld [vmem:[%s127 + $0x668] sm:$0xff]
        %v344 = vld [vmem:[%s127 + $0x670] sm:$0xff]
        %v345 = vld [vmem:[%s127 + $0x678] sm:$0xff]
        %v346 = vld [vmem:[%s127 + $0x680] sm:$0xff]
        %v347 = vld [vmem:[%s127 + $0x688] sm:$0xff]
        %v348 = vld [vmem:[%s127 + $0x690] sm:$0xff]
        %v349 = vld [vmem:[%s127 + $0x698] sm:$0xff]
        %v350 = vld [vmem:[%s127 + $0x6a0] sm:$0xff]
        %v351 = vld [vmem:[%s127 + $0x6a8] sm:$0xff]
        %v352 = vld [vmem:[%s127 + $0x6b0] sm:$0xff]
        %v353 = vld [vmem:[%s127 + $0x6b8] sm:$0xff]
        %v354 = vld [vmem:[%s127 + $0x6c0] sm:$0xff]
        %v355 = vld [vmem:[%s127 + $0x6c8] sm:$0xff]
        %v356 = vld [vmem:[%s127 + $0x6d0] sm:$0xff]
        %v357 = vld [vmem:[%s127 + $0x6d8] sm:$0xff]
        %v358 = vld [vmem:[%s127 + $0x6e0] sm:$0xff]
        %v359 = vld [vmem:[%s127 + $0x6e8] sm:$0xff]
        %v360 = vld [vmem:[%s127 + $0x6f0] sm:$0xff]
        %v361 = vld [vmem:[%s127 + $0x6f8] sm:$0xff]
        %v362 = vld [vmem:[%s127 + $0x700] sm:$0xff]
        %v363 = vld [vmem:[%s127 + $0x708] sm:$0xff]
        %v364 = vld [vmem:[%s127 + $0x710] sm:$0xff]
        %v365 = vld [vmem:[%s127 + $0x718] sm:$0xff]
        %v366 = vld [vmem:[%s127 + $0x720] sm:$0xff]
        %v367 = vld [vmem:[%s127 + $0x728] sm:$0xff]
        %v368 = vld [vmem:[%s127 + $0x730] sm:$0xff]
        %v369 = vld [vmem:[%s127 + $0x738] sm:$0xff]
        %v370 = vld [vmem:[%s127 + $0x740] sm:$0xff]
        %v371 = vld [vmem:[%s127 + $0x748] sm:$0xff]
        %v372 = vld [vmem:[%s127 + $0x750] sm:$0xff]
        %v373 = vld [vmem:[%s127 + $0x758] sm:$0xff]
        %v374 = vld [vmem:[%s127 + $0x760] sm:$0xff]
        %v375 = vld [vmem:[%s127 + $0x768] sm:$0xff]
        %v376 = vld [vmem:[%s127 + $0x770] sm:$0xff]
        %v377 = vld [vmem:[%s127 + $0x778] sm:$0xff]
        %v378 = vld [vmem:[%s127 + $0x780] sm:$0xff]
        %v379 = vld [vmem:[%s127 + $0x788] sm:$0xff]
        %v380 = vld [vmem:[%s127 + $0x790] sm:$0xff]
        %v381 = vld [vmem:[%s127 + $0x798] sm:$0xff]
        %v382 = vld [vmem:[%s127 + $0x7a0] sm:$0xff]
        %v383 = vld [vmem:[%s127 + $0x7a8] sm:$0xff]
        %v384 = vld [vmem:[%s127 + $0x7b0] sm:$0xff]
        %v385 = vld [vmem:[%s127 + $0x7b8] sm:$0xff]
        %v386 = vld [vmem:[%s127 + $0x7c0] sm:$0xff]
        %v387 = vld [vmem:[%s127 + $0x7c8] sm:$0xff]
        %v388 = vld [vmem:[%s127 + $0x7d0] sm:$0xff]
        %v389 = vld [vmem:[%s127 + $0x7d8] sm:$0xff]
        %v390 = vld [vmem:[%s127 + $0x7e0] sm:$0xff]
        %v391 = vld [vmem:[%s127 + $0x7e8] sm:$0xff]
        %v392 = vld [vmem:[%s127 + $0x7f0] sm:$0xff]
        %v393 = vld [vmem:[%s127 + $0x7f8] sm:$0xff]
        %v394 = vld [vmem:[%s127 + $0x800] sm:$0xff]
        %v395 = vld [vmem:[%s127 + $0x808] sm:$0xff]
        %v396 = vld [vmem:[%s127 + $0x810] sm:$0xff]
        %v397 = vld [vmem:[%s127 + $0x818] sm:$0xff]
        %v398 = vld [vmem:[%s127 + $0x820] sm:$0xff]
        %v399 = vld [vmem:[%s127 + $0x828] sm:$0xff]
        %v400 = vld [vmem:[%s127 + $0x830] sm:$0xff]
        %v401 = vld [vmem:[%s127 + $0x838] sm:$0xff]
        %v402 = vld [vmem:[%s127 + $0x840] sm:$0xff]
        %v403 = vld [vmem:[%s127 + $0x848] sm:$0xff]
        %v404 = vld [vmem:[%s127 + $0x850] sm:$0xff]
        %v405 = vld [vmem:[%s127 + $0x858] sm:$0xff]
        %v406 = vld [vmem:[%s127 + $0x860] sm:$0xff]
        %v407 = vld [vmem:[%s127 + $0x868] sm:$0xff]
        %v408 = vld [vmem:[%s127 + $0x870] sm:$0xff]
        %v409 = vld [vmem:[%s127 + $0x878] sm:$0xff]
        %v410 = vld [vmem:[%s127 + $0x880] sm:$0xff]
        %v411 = vld [vmem:[%s127 + $0x888] sm:$0xff]
        %v412 = vld [vmem:[%s127 + $0x890] sm:$0xff]
        %v413 = vld [vmem:[%s127 + $0x898] sm:$0xff]
        %v414 = vld [vmem:[%s127 + $0x8a0] sm:$0xff]
        %v415 = vld [vmem:[%s127 + $0x8a8] sm:$0xff]
        %v416 = vld [vmem:[%s127 + $0x8b0] sm:$0xff]
        %v417 = vld [vmem:[%s127 + $0x8b8] sm:$0xff]
        %v418 = vld [vmem:[%s127 + $0x8c0] sm:$0xff]
        %v419 = vld [vmem:[%s127 + $0x8c8] sm:$0xff]
        %v420 = vld [vmem:[%s127 + $0x8d0] sm:$0xff]
        %v421 = vld [vmem:[%s127 + $0x8d8] sm:$0xff]
        %v422 = vld [vmem:[%s127 + $0x8e0] sm:$0xff]
        %v423 = vld [vmem:[%s127 + $0x8e8] sm:$0xff]
        %v424 = vld [vmem:[%s127 + $0x8f0] sm:$0xff]
        %v425 = vld [vmem:[%s127 + $0x8f8] sm:$0xff]
        %v426 = vld [vmem:[%s127 + $0x900] sm:$0xff]
        %v427 = vld [vmem:[%s127 + $0x908] sm:$0xff]
        %v428 = vld [vmem:[%s127 + $0x910] sm:$0xff]
        %v429 = vld [vmem:[%s127 + $0x918] sm:$0xff]
        %v430 = vld [vmem:[%s127 + $0x920] sm:$0xff]
        %v431 = vld [vmem:[%s127 + $0x928] sm:$0xff]
        %v432 = vld [vmem:[%s127 + $0x930] sm:$0xff]
        %v433 = vld [vmem:[%s127 + $0x938] sm:$0xff]
        %v434 = vld [vmem:[%s127 + $0x940] sm:$0xff]
        %v435 = vld [vmem:[%s127 + $0x948] sm:$0xff]
        %v436 = vld [vmem:[%s127 + $0x950] sm:$0xff]
        %v437 = vld [vmem:[%s127 + $0x958] sm:$0xff]
        %v438 = vld [vmem:[%s127 + $0x960] sm:$0xff]
        %v439 = vld [vmem:[%s127 + $0x968] sm:$0xff]
        %v440 = vld [vmem:[%s127 + $0x970] sm:$0xff]
        %v441 = vld [vmem:[%s127 + $0x978] sm:$0xff]
        %v442 = vld [vmem:[%s127 + $0x980] sm:$0xff]
        %v443 = vld [vmem:[%s127 + $0x988] sm:$0xff]
        %v444 = vld [vmem:[%s127 + $0x990] sm:$0xff]
        %v445 = vld [vmem:[%s127 + $0x998] sm:$0xff]
        %v446 = vld [vmem:[%s127 + $0x9a0] sm:$0xff]
        %v447 = vld [vmem:[%s127 + $0x9a8] sm:$0xff]
        %v448 = vld [vmem:[%s127 + $0x9b0] sm:$0xff]
        %v449 = vld [vmem:[%s127 + $0x9b8] sm:$0xff]
        %v450 = vld [vmem:[%s127 + $0x9c0] sm:$0xff]
        %v451 = vcvt.f32.s32.to.zero.pseudo %v138
        %v452 = vcvt.f32.s32.to.zero.pseudo %v139
        %v453 = vcvt.f32.s32.to.zero.pseudo %v140
        %v454 = vcvt.f32.s32.to.zero.pseudo %v141
        %v455 = vcvt.f32.s32.to.zero.pseudo %v142
        %v456 = vcvt.f32.s32.to.zero.pseudo %v143
        %v457 = vcvt.f32.s32.to.zero.pseudo %v144
        %v458 = vcvt.f32.s32.to.zero.pseudo %v145
        %v459 = vcvt.f32.s32.to.zero.pseudo %v146
        %v460 = vcvt.f32.s32.to.zero.pseudo %v147
        %v461 = vcvt.f32.s32.to.zero.pseudo %v148
        %v462 = vcvt.f32.s32.to.zero.pseudo %v149
        %v463 = vcvt.f32.s32.to.zero.pseudo %v150
        %v464 = vcvt.f32.s32.to.zero.pseudo %v151
        %v465 = vcvt.f32.s32.to.zero.pseudo %v152
        %v466 = vcvt.f32.s32.to.zero.pseudo %v153
        %v467 = vcvt.f32.s32.to.zero.pseudo %v154
        %v468 = vcvt.f32.s32.to.zero.pseudo %v155
        %v469 = vcvt.f32.s32.to.zero.pseudo %v156
        %v470 = vcvt.f32.s32.to.zero.pseudo %v157
        %v471 = vcvt.f32.s32.to.zero.pseudo %v158
        %v472 = vcvt.f32.s32.to.zero.pseudo %v159
        %v473 = vcvt.f32.s32.to.zero.pseudo %v160
        %v474 = vcvt.f32.s32.to.zero.pseudo %v161
        %v475 = vcvt.f32.s32.to.zero.pseudo %v162
        %v476 = vcvt.f32.s32.to.zero.pseudo %v163
        %v477 = vcvt.f32.s32.to.zero.pseudo %v164
        %v478 = vcvt.f32.s32.to.zero.pseudo %v165
        %v479 = vcvt.f32.s32.to.zero.pseudo %v166
        %v480 = vcvt.f32.s32.to.zero.pseudo %v167
        %v481 = vcvt.f32.s32.to.zero.pseudo %v168
        %v482 = vcvt.f32.s32.to.zero.pseudo %v169
        %v483 = vcvt.f32.s32.to.zero.pseudo %v170
        %v484 = vcvt.f32.s32.to.zero.pseudo %v171
        %v485 = vcvt.f32.s32.to.zero.pseudo %v172
        %v486 = vcvt.f32.s32.to.zero.pseudo %v173
        %v487 = vcvt.f32.s32.to.zero.pseudo %v174
        %v488 = vcvt.f32.s32.to.zero.pseudo %v175
        %v489 = vcvt.f32.s32.to.zero.pseudo %v176
        %v490 = vcvt.f32.s32.to.zero.pseudo %v177
        %v491 = vcvt.f32.s32.to.zero.pseudo %v178
        %v492 = vcvt.f32.s32.to.zero.pseudo %v179
        %v493 = vcvt.f32.s32.to.zero.pseudo %v180
        %v494 = vcvt.f32.s32.to.zero.pseudo %v181
        %v495 = vcvt.f32.s32.to.zero.pseudo %v182
        %v496 = vcvt.f32.s32.to.zero.pseudo %v183
        %v497 = vcvt.f32.s32.to.zero.pseudo %v184
        %v498 = vcvt.f32.s32.to.zero.pseudo %v185
        %v499 = vcvt.f32.s32.to.zero.pseudo %v186
        %v500 = vcvt.f32.s32.to.zero.pseudo %v187
        %v501 = vcvt.f32.s32.to.zero.pseudo %v188
        %v502 = vcvt.f32.s32.to.zero.pseudo %v189
        %v503 = vcvt.f32.s32.to.zero.pseudo %v190
        %v504 = vcvt.f32.s32.to.zero.pseudo %v191
        %v505 = vcvt.f32.s32.to.zero.pseudo %v192
        %v506 = vcvt.f32.s32.to.zero.pseudo %v193
        %v507 = vcvt.f32.s32.to.zero.pseudo %v194
        %v508 = vcvt.f32.s32.to.zero.pseudo %v195
        %v509 = vcvt.f32.s32.to.zero.pseudo %v196
        %v510 = vcvt.f32.s32.to.zero.pseudo %v197
        %v511 = vcvt.f32.s32.to.zero.pseudo %v198
        %v512 = vcvt.f32.s32.to.zero.pseudo %v199
        %v513 = vcvt.f32.s32.to.zero.pseudo %v200
        %v514 = vcvt.f32.s32.to.zero.pseudo %v201
        %v515 = vcvt.f32.s32.to.zero.pseudo %v202
        %v516 = vcvt.f32.s32.to.zero.pseudo %v203
        %v517 = vcvt.f32.s32.to.zero.pseudo %v204
        %v518 = vcvt.f32.s32.to.zero.pseudo %v205
        %v519 = vcvt.f32.s32.to.zero.pseudo %v206
        %v520 = vcvt.f32.s32.to.zero.pseudo %v207
        %v521 = vcvt.f32.s32.to.zero.pseudo %v208
        %v522 = vcvt.f32.s32.to.zero.pseudo %v209
        %v523 = vcvt.f32.s32.to.zero.pseudo %v210
        %v524 = vcvt.f32.s32.to.zero.pseudo %v211
        %v525 = vcvt.f32.s32.to.zero.pseudo %v212
        %v526 = vcvt.f32.s32.to.zero.pseudo %v213
        %v527 = vcvt.f32.s32.to.zero.pseudo %v214
        %v528 = vcvt.f32.s32.to.zero.pseudo %v215
        %v529 = vcvt.f32.s32.to.zero.pseudo %v216
        %v530 = vcvt.f32.s32.to.zero.pseudo %v217
        %v531 = vcvt.f32.s32.to.zero.pseudo %v218
        %v532 = vcvt.f32.s32.to.zero.pseudo %v219
        %v533 = vcvt.f32.s32.to.zero.pseudo %v220
        %v534 = vcvt.f32.s32.to.zero.pseudo %v221
        %v535 = vcvt.f32.s32.to.zero.pseudo %v222
        %v536 = vcvt.f32.s32.to.zero.pseudo %v223
        %v537 = vcvt.f32.s32.to.zero.pseudo %v224
        %v538 = vcvt.f32.s32.to.zero.pseudo %v225
        %v539 = vcvt.f32.s32.to.zero.pseudo %v226
        %v540 = vcvt.f32.s32.to.zero.pseudo %v227
        %v541 = vcvt.f32.s32.to.zero.pseudo %v228
        %v542 = vcvt.f32.s32.to.zero.pseudo %v229
        %v543 = vcvt.f32.s32.to.zero.pseudo %v230
        %v544 = vcvt.f32.s32.to.zero.pseudo %v231
        %v545 = vcvt.f32.s32.to.zero.pseudo %v232
        %v546 = vcvt.f32.s32.to.zero.pseudo %v233
        %v547 = vcvt.f32.s32.to.zero.pseudo %v234
        %v548 = vcvt.f32.s32.to.zero.pseudo %v235
        %v549 = vcvt.f32.s32.to.zero.pseudo %v236
        %v550 = vcvt.f32.s32.to.zero.pseudo %v237
        %v551 = vcvt.f32.s32.to.zero.pseudo %v238
        %v552 = vcvt.f32.s32.to.zero.pseudo %v239
        %v553 = vcvt.f32.s32.to.zero.pseudo %v240
        %v554 = vcvt.f32.s32.to.zero.pseudo %v241
        %v555 = vcvt.f32.s32.to.zero.pseudo %v242
        %v556 = vcvt.f32.s32.to.zero.pseudo %v243
        %v557 = vcvt.f32.s32.to.zero.pseudo %v244
        %v558 = vcvt.f32.s32.to.zero.pseudo %v245
        %v559 = vcvt.f32.s32.to.zero.pseudo %v246
        %v560 = vcvt.f32.s32.to.zero.pseudo %v247
        %v561 = vcvt.f32.s32.to.zero.pseudo %v248
        %v562 = vcvt.f32.s32.to.zero.pseudo %v249
        %v563 = vcvt.f32.s32.to.zero.pseudo %v250
        %v564 = vcvt.f32.s32.to.zero.pseudo %v251
        %v565 = vcvt.f32.s32.to.zero.pseudo %v252
        %v566 = vcvt.f32.s32.to.zero.pseudo %v253
        %v567 = vcvt.f32.s32.to.zero.pseudo %v254
        %v568 = vcvt.f32.s32.to.zero.pseudo %v255
        %v569 = vcvt.f32.s32.to.zero.pseudo %v256
        %v570 = vcvt.f32.s32.to.zero.pseudo %v257
        %v571 = vcvt.f32.s32.to.zero.pseudo %v258
        %v572 = vcvt.f32.s32.to.zero.pseudo %v259
        %v573 = vcvt.f32.s32.to.zero.pseudo %v260
        %v574 = vcvt.f32.s32.to.zero.pseudo %v261
        %v575 = vcvt.f32.s32.to.zero.pseudo %v262
        %v576 = vcvt.f32.s32.to.zero.pseudo %v263
        %v577 = vcvt.f32.s32.to.zero.pseudo %v264
        %v578 = vcvt.f32.s32.to.zero.pseudo %v265
        %v579 = vcvt.f32.s32.to.zero.pseudo %v266
        %v580 = vcvt.f32.s32.to.zero.pseudo %v267
        %v581 = vcvt.f32.s32.to.zero.pseudo %v268
        %v582 = vcvt.f32.s32.to.zero.pseudo %v269
        %v583 = vcvt.f32.s32.to.zero.pseudo %v270
        %v584 = vcvt.f32.s32.to.zero.pseudo %v271
        %v585 = vcvt.f32.s32.to.zero.pseudo %v272
        %v586 = vcvt.f32.s32.to.zero.pseudo %v273
        %v587 = vcvt.f32.s32.to.zero.pseudo %v274
        %v588 = vcvt.f32.s32.to.zero.pseudo %v275
        %v589 = vcvt.f32.s32.to.zero.pseudo %v276
        %v590 = vcvt.f32.s32.to.zero.pseudo %v277
        %v591 = vcvt.f32.s32.to.zero.pseudo %v278
        %v592 = vcvt.f32.s32.to.zero.pseudo %v279
        %v593 = vcvt.f32.s32.to.zero.pseudo %v280
        %v594 = vcvt.f32.s32.to.zero.pseudo %v281
        %v595 = vcvt.f32.s32.to.zero.pseudo %v282
        %v596 = vcvt.f32.s32.to.zero.pseudo %v283
        %v597 = vcvt.f32.s32.to.zero.pseudo %v284
        %v598 = vcvt.f32.s32.to.zero.pseudo %v285
        %v599 = vcvt.f32.s32.to.zero.pseudo %v286
        %v600 = vcvt.f32.s32.to.zero.pseudo %v287
        %v601 = vcvt.f32.s32.to.zero.pseudo %v288
        %v602 = vcvt.f32.s32.to.zero.pseudo %v289
        %v603 = vcvt.f32.s32.to.zero.pseudo %v290
        %v604 = vcvt.f32.s32.to.zero.pseudo %v291
        %v605 = vcvt.f32.s32.to.zero.pseudo %v292
        %v606 = vcvt.f32.s32.to.zero.pseudo %v293
        %v607 = vcvt.f32.s32.to.zero.pseudo %v294
        %v608 = vcvt.f32.s32.to.zero.pseudo %v295
        %v609 = vcvt.f32.s32.to.zero.pseudo %v296
        %v610 = vcvt.f32.s32.to.zero.pseudo %v297
        %v611 = vcvt.f32.s32.to.zero.pseudo %v298
        %v612 = vcvt.f32.s32.to.zero.pseudo %v299
        %v613 = vcvt.f32.s32.to.zero.pseudo %v300
        %v614 = vcvt.f32.s32.to.zero.pseudo %v301
        %v615 = vcvt.f32.s32.to.zero.pseudo %v302
        %v616 = vcvt.f32.s32.to.zero.pseudo %v303
        %v617 = vcvt.f32.s32.to.zero.pseudo %v304
        %v618 = vcvt.f32.s32.to.zero.pseudo %v305
        %v619 = vcvt.f32.s32.to.zero.pseudo %v306
        %v620 = vcvt.f32.s32.to.zero.pseudo %v307
        %v621 = vcvt.f32.s32.to.zero.pseudo %v308
        %v622 = vcvt.f32.s32.to.zero.pseudo %v309
        %v623 = vcvt.f32.s32.to.zero.pseudo %v310
        %v624 = vcvt.f32.s32.to.zero.pseudo %v311
        %v625 = vcvt.f32.s32.to.zero.pseudo %v312
        %v626 = vcvt.f32.s32.to.zero.pseudo %v313
        %v627 = vcvt.f32.s32.to.zero.pseudo %v314
        %v628 = vcvt.f32.s32.to.zero.pseudo %v315
        %v629 = vcvt.f32.s32.to.zero.pseudo %v316
        %v630 = vcvt.f32.s32.to.zero.pseudo %v317
        %v631 = vcvt.f32.s32.to.zero.pseudo %v318
        %v632 = vcvt.f32.s32.to.zero.pseudo %v319
        %v633 = vcvt.f32.s32.to.zero.pseudo %v320
        %v634 = vcvt.f32.s32.to.zero.pseudo %v321
        %v635 = vcvt.f32.s32.to.zero.pseudo %v322
        %v636 = vcvt.f32.s32.to.zero.pseudo %v323
        %v637 = vcvt.f32.s32.to.zero.pseudo %v324
        %v638 = vcvt.f32.s32.to.zero.pseudo %v325
        %v639 = vcvt.f32.s32.to.zero.pseudo %v326
        %v640 = vcvt.f32.s32.to.zero.pseudo %v327
        %v641 = vcvt.f32.s32.to.zero.pseudo %v328
        %v642 = vcvt.f32.s32.to.zero.pseudo %v329
        %v643 = vcvt.f32.s32.to.zero.pseudo %v330
        %v644 = vcvt.f32.s32.to.zero.pseudo %v331
        %v645 = vcvt.f32.s32.to.zero.pseudo %v332
        %v646 = vcvt.f32.s32.to.zero.pseudo %v333
        %v647 = vcvt.f32.s32.to.zero.pseudo %v334
        %v648 = vcvt.f32.s32.to.zero.pseudo %v335
        %v649 = vcvt.f32.s32.to.zero.pseudo %v336
        %v650 = vcvt.f32.s32.to.zero.pseudo %v337
        %v651 = vcvt.f32.s32.to.zero.pseudo %v338
        %v652 = vcvt.f32.s32.to.zero.pseudo %v339
        %v653 = vcvt.f32.s32.to.zero.pseudo %v340
        %v654 = vcvt.f32.s32.to.zero.pseudo %v341
        %v655 = vcvt.f32.s32.to.zero.pseudo %v342
        %v656 = vcvt.f32.s32.to.zero.pseudo %v343
        %v657 = vcvt.f32.s32.to.zero.pseudo %v344
        %v658 = vcvt.f32.s32.to.zero.pseudo %v345
        %v659 = vcvt.f32.s32.to.zero.pseudo %v346
        %v660 = vcvt.f32.s32.to.zero.pseudo %v347
        %v661 = vcvt.f32.s32.to.zero.pseudo %v348
        %v662 = vcvt.f32.s32.to.zero.pseudo %v349
        %v663 = vcvt.f32.s32.to.zero.pseudo %v350
        %v664 = vcvt.f32.s32.to.zero.pseudo %v351
        %v665 = vcvt.f32.s32.to.zero.pseudo %v352
        %v666 = vcvt.f32.s32.to.zero.pseudo %v353
        %v667 = vcvt.f32.s32.to.zero.pseudo %v354
        %v668 = vcvt.f32.s32.to.zero.pseudo %v355
        %v669 = vcvt.f32.s32.to.zero.pseudo %v356
        %v670 = vcvt.f32.s32.to.zero.pseudo %v357
        %v671 = vcvt.f32.s32.to.zero.pseudo %v358
        %v672 = vcvt.f32.s32.to.zero.pseudo %v359
        %v673 = vcvt.f32.s32.to.zero.pseudo %v360
        %v674 = vcvt.f32.s32.to.zero.pseudo %v361
        %v675 = vcvt.f32.s32.to.zero.pseudo %v362
        %v676 = vcvt.f32.s32.to.zero.pseudo %v363
        %v677 = vcvt.f32.s32.to.zero.pseudo %v364
        %v678 = vcvt.f32.s32.to.zero.pseudo %v365
        %v679 = vcvt.f32.s32.to.zero.pseudo %v366
        %v680 = vcvt.f32.s32.to.zero.pseudo %v367
        %v681 = vcvt.f32.s32.to.zero.pseudo %v368
        %v682 = vcvt.f32.s32.to.zero.pseudo %v369
        %v683 = vcvt.f32.s32.to.zero.pseudo %v370
        %v684 = vcvt.f32.s32.to.zero.pseudo %v371
        %v685 = vcvt.f32.s32.to.zero.pseudo %v372
        %v686 = vcvt.f32.s32.to.zero.pseudo %v373
        %v687 = vcvt.f32.s32.to.zero.pseudo %v374
        %v688 = vcvt.f32.s32.to.zero.pseudo %v375
        %v689 = vcvt.f32.s32.to.zero.pseudo %v376
        %v690 = vcvt.f32.s32.to.zero.pseudo %v377
        %v691 = vcvt.f32.s32.to.zero.pseudo %v378
        %v692 = vcvt.f32.s32.to.zero.pseudo %v379
        %v693 = vcvt.f32.s32.to.zero.pseudo %v380
        %v694 = vcvt.f32.s32.to.zero.pseudo %v381
        %v695 = vcvt.f32.s32.to.zero.pseudo %v382
        %v696 = vcvt.f32.s32.to.zero.pseudo %v383
        %v697 = vcvt.f32.s32.to.zero.pseudo %v384
        %v698 = vcvt.f32.s32.to.zero.pseudo %v385
        %v699 = vcvt.f32.s32.to.zero.pseudo %v386
        %v700 = vcvt.f32.s32.to.zero.pseudo %v387
        %v701 = vcvt.f32.s32.to.zero.pseudo %v388
        %v702 = vcvt.f32.s32.to.zero.pseudo %v389
        %v703 = vcvt.f32.s32.to.zero.pseudo %v390
        %v704 = vcvt.f32.s32.to.zero.pseudo %v391
        %v705 = vcvt.f32.s32.to.zero.pseudo %v392
        %v706 = vcvt.f32.s32.to.zero.pseudo %v393
        %v707 = vcvt.f32.s32.to.zero.pseudo %v394
        %v708 = vcvt.f32.s32.to.zero.pseudo %v395
        %v709 = vcvt.f32.s32.to.zero.pseudo %v396
        %v710 = vcvt.f32.s32.to.zero.pseudo %v397
        %v711 = vcvt.f32.s32.to.zero.pseudo %v398
        %v712 = vcvt.f32.s32.to.zero.pseudo %v399
        %v713 = vcvt.f32.s32.to.zero.pseudo %v400
        %v714 = vcvt.f32.s32.to.zero.pseudo %v401
        %v715 = vcvt.f32.s32.to.zero.pseudo %v402
        %v716 = vcvt.f32.s32.to.zero.pseudo %v403
        %v717 = vcvt.f32.s32.to.zero.pseudo %v404
        %v718 = vcvt.f32.s32.to.zero.pseudo %v405
        %v719 = vcvt.f32.s32.to.zero.pseudo %v406
        %v720 = vcvt.f32.s32.to.zero.pseudo %v407
        %v721 = vcvt.f32.s32.to.zero.pseudo %v408
        %v722 = vcvt.f32.s32.to.zero.pseudo %v409
        %v723 = vcvt.f32.s32.to.zero.pseudo %v410
        %v724 = vcvt.f32.s32.to.zero.pseudo %v411
        %v725 = vcvt.f32.s32.to.zero.pseudo %v412
        %v726 = vcvt.f32.s32.to.zero.pseudo %v413
        %v727 = vcvt.f32.s32.to.zero.pseudo %v414
        %v728 = vcvt.f32.s32.to.zero.pseudo %v415
        %v729 = vcvt.f32.s32.to.zero.pseudo %v416
        %v730 = vcvt.f32.s32.to.zero.pseudo %v417
        %v731 = vcvt.f32.s32.to.zero.pseudo %v418
        %v732 = vcvt.f32.s32.to.zero.pseudo %v419
        %v733 = vcvt.f32.s32.to.zero.pseudo %v420
        %v734 = vcvt.f32.s32.to.zero.pseudo %v421
        %v735 = vcvt.f32.s32.to.zero.pseudo %v422
        %v736 = vcvt.f32.s32.to.zero.pseudo %v423
        %v737 = vcvt.f32.s32.to.zero.pseudo %v424
        %v738 = vcvt.f32.s32.to.zero.pseudo %v425
        %v739 = vcvt.f32.s32.to.zero.pseudo %v426
        %v740 = vcvt.f32.s32.to.zero.pseudo %v427
        %v741 = vcvt.f32.s32.to.zero.pseudo %v428
        %v742 = vcvt.f32.s32.to.zero.pseudo %v429
        %v743 = vcvt.f32.s32.to.zero.pseudo %v430
        %v744 = vcvt.f32.s32.to.zero.pseudo %v431
        %v745 = vcvt.f32.s32.to.zero.pseudo %v432
        %v746 = vcvt.f32.s32.to.zero.pseudo %v433
        %v747 = vcvt.f32.s32.to.zero.pseudo %v434
        %v748 = vcvt.f32.s32.to.zero.pseudo %v435
        %v749 = vcvt.f32.s32.to.zero.pseudo %v436
        %v750 = vcvt.f32.s32.to.zero.pseudo %v437
        %v751 = vcvt.f32.s32.to.zero.pseudo %v438
        %v752 = vcvt.f32.s32.to.zero.pseudo %v439
        %v753 = vcvt.f32.s32.to.zero.pseudo %v440
        %v754 = vcvt.f32.s32.to.zero.pseudo %v441
        %v755 = vcvt.f32.s32.to.zero.pseudo %v442
        %v756 = vcvt.f32.s32.to.zero.pseudo %v443
        %v757 = vcvt.f32.s32.to.zero.pseudo %v444
        %v758 = vcvt.f32.s32.to.zero.pseudo %v445
        %v759 = vcvt.f32.s32.to.zero.pseudo %v446
        %v760 = vcvt.f32.s32.to.zero.pseudo %v447
        %v761 = vcvt.f32.s32.to.zero.pseudo %v448
        %v762 = vcvt.f32.s32.to.zero.pseudo %v449
        %v763 = vcvt.f32.s32.to.zero.pseudo %v450
        %vm764 = vcmask 72704
        %765 = vst.msk [vmem:[%s118] sm:$0xff] %vm764, %v451
        %766 = vst.msk [vmem:[%s118 + $0x8] sm:$0xff] %vm764, %v452
        %767 = vst.msk [vmem:[%s118 + $0x10] sm:$0xff] %vm764, %v453
        %768 = vst.msk [vmem:[%s118 + $0x18] sm:$0xff] %vm764, %v454
        %769 = vst.msk [vmem:[%s118 + $0x20] sm:$0xff] %vm764, %v455
        %770 = vst.msk [vmem:[%s118 + $0x28] sm:$0xff] %vm764, %v456
        %771 = vst.msk [vmem:[%s118 + $0x30] sm:$0xff] %vm764, %v457
        %772 = vst.msk [vmem:[%s118 + $0x38] sm:$0xff] %vm764, %v458
        %773 = vst.msk [vmem:[%s118 + $0x40] sm:$0xff] %vm764, %v459
        %774 = vst.msk [vmem:[%s118 + $0x48] sm:$0xff] %vm764, %v460
        %775 = vst.msk [vmem:[%s118 + $0x50] sm:$0xff] %vm764, %v461
        %776 = vst.msk [vmem:[%s118 + $0x58] sm:$0xff] %vm764, %v462
        %777 = vst.msk [vmem:[%s118 + $0x60] sm:$0xff] %vm764, %v463
        %778 = vst.msk [vmem:[%s118 + $0x68] sm:$0xff] %vm764, %v464
        %779 = vst.msk [vmem:[%s118 + $0x70] sm:$0xff] %vm764, %v465
        %780 = vst.msk [vmem:[%s118 + $0x78] sm:$0xff] %vm764, %v466
        %781 = vst.msk [vmem:[%s118 + $0x80] sm:$0xff] %vm764, %v467
        %782 = vst.msk [vmem:[%s118 + $0x88] sm:$0xff] %vm764, %v468
        %783 = vst.msk [vmem:[%s118 + $0x90] sm:$0xff] %vm764, %v469
        %784 = vst.msk [vmem:[%s118 + $0x98] sm:$0xff] %vm764, %v470
        %785 = vst.msk [vmem:[%s118 + $0xa0] sm:$0xff] %vm764, %v471
        %786 = vst.msk [vmem:[%s118 + $0xa8] sm:$0xff] %vm764, %v472
        %787 = vst.msk [vmem:[%s118 + $0xb0] sm:$0xff] %vm764, %v473
        %788 = vst.msk [vmem:[%s118 + $0xb8] sm:$0xff] %vm764, %v474
        %789 = vst.msk [vmem:[%s118 + $0xc0] sm:$0xff] %vm764, %v475
        %790 = vst.msk [vmem:[%s118 + $0xc8] sm:$0xff] %vm764, %v476
        %791 = vst.msk [vmem:[%s118 + $0xd0] sm:$0xff] %vm764, %v477
        %792 = vst.msk [vmem:[%s118 + $0xd8] sm:$0xff] %vm764, %v478
        %793 = vst.msk [vmem:[%s118 + $0xe0] sm:$0xff] %vm764, %v479
        %794 = vst.msk [vmem:[%s118 + $0xe8] sm:$0xff] %vm764, %v480
        %795 = vst.msk [vmem:[%s118 + $0xf0] sm:$0xff] %vm764, %v481
        %796 = vst.msk [vmem:[%s118 + $0xf8] sm:$0xff] %vm764, %v482
        %797 = vst.msk [vmem:[%s118 + $0x100] sm:$0xff] %vm764, %v483
        %798 = vst.msk [vmem:[%s118 + $0x108] sm:$0xff] %vm764, %v484
        %799 = vst.msk [vmem:[%s118 + $0x110] sm:$0xff] %vm764, %v485
        %800 = vst.msk [vmem:[%s118 + $0x118] sm:$0xff] %vm764, %v486
        %801 = vst.msk [vmem:[%s118 + $0x120] sm:$0xff] %vm764, %v487
        %802 = vst.msk [vmem:[%s118 + $0x128] sm:$0xff] %vm764, %v488
        %803 = vst.msk [vmem:[%s118 + $0x130] sm:$0xff] %vm764, %v489
        %804 = vst.msk [vmem:[%s118 + $0x138] sm:$0xff] %vm764, %v490
        %805 = vst.msk [vmem:[%s118 + $0x140] sm:$0xff] %vm764, %v491
        %806 = vst.msk [vmem:[%s118 + $0x148] sm:$0xff] %vm764, %v492
        %807 = vst.msk [vmem:[%s118 + $0x150] sm:$0xff] %vm764, %v493
        %808 = vst.msk [vmem:[%s118 + $0x158] sm:$0xff] %vm764, %v494
        %809 = vst.msk [vmem:[%s118 + $0x160] sm:$0xff] %vm764, %v495
        %810 = vst.msk [vmem:[%s118 + $0x168] sm:$0xff] %vm764, %v496
        %811 = vst.msk [vmem:[%s118 + $0x170] sm:$0xff] %vm764, %v497
        %812 = vst.msk [vmem:[%s118 + $0x178] sm:$0xff] %vm764, %v498
        %813 = vst.msk [vmem:[%s118 + $0x180] sm:$0xff] %vm764, %v499
        %814 = vst.msk [vmem:[%s118 + $0x188] sm:$0xff] %vm764, %v500
        %815 = vst.msk [vmem:[%s118 + $0x190] sm:$0xff] %vm764, %v501
        %816 = vst.msk [vmem:[%s118 + $0x198] sm:$0xff] %vm764, %v502
        %817 = vst.msk [vmem:[%s118 + $0x1a0] sm:$0xff] %vm764, %v503
        %818 = vst.msk [vmem:[%s118 + $0x1a8] sm:$0xff] %vm764, %v504
        %819 = vst.msk [vmem:[%s118 + $0x1b0] sm:$0xff] %vm764, %v505
        %820 = vst.msk [vmem:[%s118 + $0x1b8] sm:$0xff] %vm764, %v506
        %821 = vst.msk [vmem:[%s118 + $0x1c0] sm:$0xff] %vm764, %v507
        %822 = vst.msk [vmem:[%s118 + $0x1c8] sm:$0xff] %vm764, %v508
        %823 = vst.msk [vmem:[%s118 + $0x1d0] sm:$0xff] %vm764, %v509
        %824 = vst.msk [vmem:[%s118 + $0x1d8] sm:$0xff] %vm764, %v510
        %825 = vst.msk [vmem:[%s118 + $0x1e0] sm:$0xff] %vm764, %v511
        %826 = vst.msk [vmem:[%s118 + $0x1e8] sm:$0xff] %vm764, %v512
        %827 = vst.msk [vmem:[%s118 + $0x1f0] sm:$0xff] %vm764, %v513
        %828 = vst.msk [vmem:[%s118 + $0x1f8] sm:$0xff] %vm764, %v514
        %829 = vst.msk [vmem:[%s118 + $0x200] sm:$0xff] %vm764, %v515
        %830 = vst.msk [vmem:[%s118 + $0x208] sm:$0xff] %vm764, %v516
        %831 = vst.msk [vmem:[%s118 + $0x210] sm:$0xff] %vm764, %v517
        %832 = vst.msk [vmem:[%s118 + $0x218] sm:$0xff] %vm764, %v518
        %833 = vst.msk [vmem:[%s118 + $0x220] sm:$0xff] %vm764, %v519
        %834 = vst.msk [vmem:[%s118 + $0x228] sm:$0xff] %vm764, %v520
        %835 = vst.msk [vmem:[%s118 + $0x230] sm:$0xff] %vm764, %v521
        %836 = vst.msk [vmem:[%s118 + $0x238] sm:$0xff] %vm764, %v522
        %837 = vst.msk [vmem:[%s118 + $0x240] sm:$0xff] %vm764, %v523
        %838 = vst.msk [vmem:[%s118 + $0x248] sm:$0xff] %vm764, %v524
        %839 = vst.msk [vmem:[%s118 + $0x250] sm:$0xff] %vm764, %v525
        %840 = vst.msk [vmem:[%s118 + $0x258] sm:$0xff] %vm764, %v526
        %841 = vst.msk [vmem:[%s118 + $0x260] sm:$0xff] %vm764, %v527
        %842 = vst.msk [vmem:[%s118 + $0x268] sm:$0xff] %vm764, %v528
        %843 = vst.msk [vmem:[%s118 + $0x270] sm:$0xff] %vm764, %v529
        %844 = vst.msk [vmem:[%s118 + $0x278] sm:$0xff] %vm764, %v530
        %845 = vst.msk [vmem:[%s118 + $0x280] sm:$0xff] %vm764, %v531
        %846 = vst.msk [vmem:[%s118 + $0x288] sm:$0xff] %vm764, %v532
        %847 = vst.msk [vmem:[%s118 + $0x290] sm:$0xff] %vm764, %v533
        %848 = vst.msk [vmem:[%s118 + $0x298] sm:$0xff] %vm764, %v534
        %849 = vst.msk [vmem:[%s118 + $0x2a0] sm:$0xff] %vm764, %v535
        %850 = vst.msk [vmem:[%s118 + $0x2a8] sm:$0xff] %vm764, %v536
        %851 = vst.msk [vmem:[%s118 + $0x2b0] sm:$0xff] %vm764, %v537
        %852 = vst.msk [vmem:[%s118 + $0x2b8] sm:$0xff] %vm764, %v538
        %853 = vst.msk [vmem:[%s118 + $0x2c0] sm:$0xff] %vm764, %v539
        %854 = vst.msk [vmem:[%s118 + $0x2c8] sm:$0xff] %vm764, %v540
        %855 = vst.msk [vmem:[%s118 + $0x2d0] sm:$0xff] %vm764, %v541
        %856 = vst.msk [vmem:[%s118 + $0x2d8] sm:$0xff] %vm764, %v542
        %857 = vst.msk [vmem:[%s118 + $0x2e0] sm:$0xff] %vm764, %v543
        %858 = vst.msk [vmem:[%s118 + $0x2e8] sm:$0xff] %vm764, %v544
        %859 = vst.msk [vmem:[%s118 + $0x2f0] sm:$0xff] %vm764, %v545
        %860 = vst.msk [vmem:[%s118 + $0x2f8] sm:$0xff] %vm764, %v546
        %861 = vst.msk [vmem:[%s118 + $0x300] sm:$0xff] %vm764, %v547
        %862 = vst.msk [vmem:[%s118 + $0x308] sm:$0xff] %vm764, %v548
        %863 = vst.msk [vmem:[%s118 + $0x310] sm:$0xff] %vm764, %v549
        %864 = vst.msk [vmem:[%s118 + $0x318] sm:$0xff] %vm764, %v550
        %865 = vst.msk [vmem:[%s118 + $0x320] sm:$0xff] %vm764, %v551
        %866 = vst.msk [vmem:[%s118 + $0x328] sm:$0xff] %vm764, %v552
        %867 = vst.msk [vmem:[%s118 + $0x330] sm:$0xff] %vm764, %v553
        %868 = vst.msk [vmem:[%s118 + $0x338] sm:$0xff] %vm764, %v554
        %869 = vst.msk [vmem:[%s118 + $0x340] sm:$0xff] %vm764, %v555
        %870 = vst.msk [vmem:[%s118 + $0x348] sm:$0xff] %vm764, %v556
        %871 = vst.msk [vmem:[%s118 + $0x350] sm:$0xff] %vm764, %v557
        %872 = vst.msk [vmem:[%s118 + $0x358] sm:$0xff] %vm764, %v558
        %873 = vst.msk [vmem:[%s118 + $0x360] sm:$0xff] %vm764, %v559
        %874 = vst.msk [vmem:[%s118 + $0x368] sm:$0xff] %vm764, %v560
        %875 = vst.msk [vmem:[%s118 + $0x370] sm:$0xff] %vm764, %v561
        %876 = vst.msk [vmem:[%s118 + $0x378] sm:$0xff] %vm764, %v562
        %877 = vst.msk [vmem:[%s118 + $0x380] sm:$0xff] %vm764, %v563
        %878 = vst.msk [vmem:[%s118 + $0x388] sm:$0xff] %vm764, %v564
        %879 = vst.msk [vmem:[%s118 + $0x390] sm:$0xff] %vm764, %v565
        %880 = vst.msk [vmem:[%s118 + $0x398] sm:$0xff] %vm764, %v566
        %881 = vst.msk [vmem:[%s118 + $0x3a0] sm:$0xff] %vm764, %v567
        %882 = vst.msk [vmem:[%s118 + $0x3a8] sm:$0xff] %vm764, %v568
        %883 = vst.msk [vmem:[%s118 + $0x3b0] sm:$0xff] %vm764, %v569
        %884 = vst.msk [vmem:[%s118 + $0x3b8] sm:$0xff] %vm764, %v570
        %885 = vst.msk [vmem:[%s118 + $0x3c0] sm:$0xff] %vm764, %v571
        %886 = vst.msk [vmem:[%s118 + $0x3c8] sm:$0xff] %vm764, %v572
        %887 = vst.msk [vmem:[%s118 + $0x3d0] sm:$0xff] %vm764, %v573
        %888 = vst.msk [vmem:[%s118 + $0x3d8] sm:$0xff] %vm764, %v574
        %889 = vst.msk [vmem:[%s118 + $0x3e0] sm:$0xff] %vm764, %v575
        %890 = vst.msk [vmem:[%s118 + $0x3e8] sm:$0xff] %vm764, %v576
        %891 = vst.msk [vmem:[%s118 + $0x3f0] sm:$0xff] %vm764, %v577
        %892 = vst.msk [vmem:[%s118 + $0x3f8] sm:$0xff] %vm764, %v578
        %893 = vst.msk [vmem:[%s118 + $0x400] sm:$0xff] %vm764, %v579
        %894 = vst.msk [vmem:[%s118 + $0x408] sm:$0xff] %vm764, %v580
        %895 = vst.msk [vmem:[%s118 + $0x410] sm:$0xff] %vm764, %v581
        %896 = vst.msk [vmem:[%s118 + $0x418] sm:$0xff] %vm764, %v582
        %897 = vst.msk [vmem:[%s118 + $0x420] sm:$0xff] %vm764, %v583
        %898 = vst.msk [vmem:[%s118 + $0x428] sm:$0xff] %vm764, %v584
        %899 = vst.msk [vmem:[%s118 + $0x430] sm:$0xff] %vm764, %v585
        %900 = vst.msk [vmem:[%s118 + $0x438] sm:$0xff] %vm764, %v586
        %901 = vst.msk [vmem:[%s118 + $0x440] sm:$0xff] %vm764, %v587
        %902 = vst.msk [vmem:[%s118 + $0x448] sm:$0xff] %vm764, %v588
        %903 = vst.msk [vmem:[%s118 + $0x450] sm:$0xff] %vm764, %v589
        %904 = vst.msk [vmem:[%s118 + $0x458] sm:$0xff] %vm764, %v590
        %905 = vst.msk [vmem:[%s118 + $0x460] sm:$0xff] %vm764, %v591
        %906 = vst.msk [vmem:[%s118 + $0x468] sm:$0xff] %vm764, %v592
        %907 = vst.msk [vmem:[%s118 + $0x470] sm:$0xff] %vm764, %v593
        %908 = vst.msk [vmem:[%s118 + $0x478] sm:$0xff] %vm764, %v594
        %909 = vst.msk [vmem:[%s118 + $0x480] sm:$0xff] %vm764, %v595
        %910 = vst.msk [vmem:[%s118 + $0x488] sm:$0xff] %vm764, %v596
        %911 = vst.msk [vmem:[%s118 + $0x490] sm:$0xff] %vm764, %v597
        %912 = vst.msk [vmem:[%s118 + $0x498] sm:$0xff] %vm764, %v598
        %913 = vst.msk [vmem:[%s118 + $0x4a0] sm:$0xff] %vm764, %v599
        %914 = vst.msk [vmem:[%s118 + $0x4a8] sm:$0xff] %vm764, %v600
        %915 = vst.msk [vmem:[%s118 + $0x4b0] sm:$0xff] %vm764, %v601
        %916 = vst.msk [vmem:[%s118 + $0x4b8] sm:$0xff] %vm764, %v602
        %917 = vst.msk [vmem:[%s118 + $0x4c0] sm:$0xff] %vm764, %v603
        %918 = vst.msk [vmem:[%s118 + $0x4c8] sm:$0xff] %vm764, %v604
        %919 = vst.msk [vmem:[%s118 + $0x4d0] sm:$0xff] %vm764, %v605
        %920 = vst.msk [vmem:[%s118 + $0x4d8] sm:$0xff] %vm764, %v606
        %921 = vst.msk [vmem:[%s118 + $0x4e0] sm:$0xff] %vm764, %v607
        %922 = vst.msk [vmem:[%s118 + $0x4e8] sm:$0xff] %vm764, %v608
        %923 = vst.msk [vmem:[%s118 + $0x4f0] sm:$0xff] %vm764, %v609
        %924 = vst.msk [vmem:[%s118 + $0x4f8] sm:$0xff] %vm764, %v610
        %925 = vst.msk [vmem:[%s118 + $0x500] sm:$0xff] %vm764, %v611
        %926 = vst.msk [vmem:[%s118 + $0x508] sm:$0xff] %vm764, %v612
        %927 = vst.msk [vmem:[%s118 + $0x510] sm:$0xff] %vm764, %v613
        %928 = vst.msk [vmem:[%s118 + $0x518] sm:$0xff] %vm764, %v614
        %929 = vst.msk [vmem:[%s118 + $0x520] sm:$0xff] %vm764, %v615
        %930 = vst.msk [vmem:[%s118 + $0x528] sm:$0xff] %vm764, %v616
        %931 = vst.msk [vmem:[%s118 + $0x530] sm:$0xff] %vm764, %v617
        %932 = vst.msk [vmem:[%s118 + $0x538] sm:$0xff] %vm764, %v618
        %933 = vst.msk [vmem:[%s118 + $0x540] sm:$0xff] %vm764, %v619
        %934 = vst.msk [vmem:[%s118 + $0x548] sm:$0xff] %vm764, %v620
        %935 = vst.msk [vmem:[%s118 + $0x550] sm:$0xff] %vm764, %v621
        %936 = vst.msk [vmem:[%s118 + $0x558] sm:$0xff] %vm764, %v622
        %937 = vst.msk [vmem:[%s118 + $0x560] sm:$0xff] %vm764, %v623
        %938 = vst.msk [vmem:[%s118 + $0x568] sm:$0xff] %vm764, %v624
        %939 = vst.msk [vmem:[%s118 + $0x570] sm:$0xff] %vm764, %v625
        %940 = vst.msk [vmem:[%s118 + $0x578] sm:$0xff] %vm764, %v626
        %941 = vst.msk [vmem:[%s118 + $0x580] sm:$0xff] %vm764, %v627
        %942 = vst.msk [vmem:[%s118 + $0x588] sm:$0xff] %vm764, %v628
        %943 = vst.msk [vmem:[%s118 + $0x590] sm:$0xff] %vm764, %v629
        %944 = vst.msk [vmem:[%s118 + $0x598] sm:$0xff] %vm764, %v630
        %945 = vst.msk [vmem:[%s118 + $0x5a0] sm:$0xff] %vm764, %v631
        %946 = vst.msk [vmem:[%s118 + $0x5a8] sm:$0xff] %vm764, %v632
        %947 = vst.msk [vmem:[%s118 + $0x5b0] sm:$0xff] %vm764, %v633
        %948 = vst.msk [vmem:[%s118 + $0x5b8] sm:$0xff] %vm764, %v634
        %949 = vst.msk [vmem:[%s118 + $0x5c0] sm:$0xff] %vm764, %v635
        %950 = vst.msk [vmem:[%s118 + $0x5c8] sm:$0xff] %vm764, %v636
        %951 = vst.msk [vmem:[%s118 + $0x5d0] sm:$0xff] %vm764, %v637
        %952 = vst.msk [vmem:[%s118 + $0x5d8] sm:$0xff] %vm764, %v638
        %953 = vst.msk [vmem:[%s118 + $0x5e0] sm:$0xff] %vm764, %v639
        %954 = vst.msk [vmem:[%s118 + $0x5e8] sm:$0xff] %vm764, %v640
        %955 = vst.msk [vmem:[%s118 + $0x5f0] sm:$0xff] %vm764, %v641
        %956 = vst.msk [vmem:[%s118 + $0x5f8] sm:$0xff] %vm764, %v642
        %957 = vst.msk [vmem:[%s118 + $0x600] sm:$0xff] %vm764, %v643
        %958 = vst.msk [vmem:[%s118 + $0x608] sm:$0xff] %vm764, %v644
        %959 = vst.msk [vmem:[%s118 + $0x610] sm:$0xff] %vm764, %v645
        %960 = vst.msk [vmem:[%s118 + $0x618] sm:$0xff] %vm764, %v646
        %961 = vst.msk [vmem:[%s118 + $0x620] sm:$0xff] %vm764, %v647
        %962 = vst.msk [vmem:[%s118 + $0x628] sm:$0xff] %vm764, %v648
        %963 = vst.msk [vmem:[%s118 + $0x630] sm:$0xff] %vm764, %v649
        %964 = vst.msk [vmem:[%s118 + $0x638] sm:$0xff] %vm764, %v650
        %965 = vst.msk [vmem:[%s118 + $0x640] sm:$0xff] %vm764, %v651
        %966 = vst.msk [vmem:[%s118 + $0x648] sm:$0xff] %vm764, %v652
        %967 = vst.msk [vmem:[%s118 + $0x650] sm:$0xff] %vm764, %v653
        %968 = vst.msk [vmem:[%s118 + $0x658] sm:$0xff] %vm764, %v654
        %969 = vst.msk [vmem:[%s118 + $0x660] sm:$0xff] %vm764, %v655
        %970 = vst.msk [vmem:[%s118 + $0x668] sm:$0xff] %vm764, %v656
        %971 = vst.msk [vmem:[%s118 + $0x670] sm:$0xff] %vm764, %v657
        %972 = vst.msk [vmem:[%s118 + $0x678] sm:$0xff] %vm764, %v658
        %973 = vst.msk [vmem:[%s118 + $0x680] sm:$0xff] %vm764, %v659
        %974 = vst.msk [vmem:[%s118 + $0x688] sm:$0xff] %vm764, %v660
        %975 = vst.msk [vmem:[%s118 + $0x690] sm:$0xff] %vm764, %v661
        %976 = vst.msk [vmem:[%s118 + $0x698] sm:$0xff] %vm764, %v662
        %977 = vst.msk [vmem:[%s118 + $0x6a0] sm:$0xff] %vm764, %v663
        %978 = vst.msk [vmem:[%s118 + $0x6a8] sm:$0xff] %vm764, %v664
        %979 = vst.msk [vmem:[%s118 + $0x6b0] sm:$0xff] %vm764, %v665
        %980 = vst.msk [vmem:[%s118 + $0x6b8] sm:$0xff] %vm764, %v666
        %981 = vst.msk [vmem:[%s118 + $0x6c0] sm:$0xff] %vm764, %v667
        %982 = vst.msk [vmem:[%s118 + $0x6c8] sm:$0xff] %vm764, %v668
        %983 = vst.msk [vmem:[%s118 + $0x6d0] sm:$0xff] %vm764, %v669
        %984 = vst.msk [vmem:[%s118 + $0x6d8] sm:$0xff] %vm764, %v670
        %985 = vst.msk [vmem:[%s118 + $0x6e0] sm:$0xff] %vm764, %v671
        %986 = vst.msk [vmem:[%s118 + $0x6e8] sm:$0xff] %vm764, %v672
        %987 = vst.msk [vmem:[%s118 + $0x6f0] sm:$0xff] %vm764, %v673
        %988 = vst.msk [vmem:[%s118 + $0x6f8] sm:$0xff] %vm764, %v674
        %989 = vst.msk [vmem:[%s118 + $0x700] sm:$0xff] %vm764, %v675
        %990 = vst.msk [vmem:[%s118 + $0x708] sm:$0xff] %vm764, %v676
        %991 = vst.msk [vmem:[%s118 + $0x710] sm:$0xff] %vm764, %v677
        %992 = vst.msk [vmem:[%s118 + $0x718] sm:$0xff] %vm764, %v678
        %993 = vst.msk [vmem:[%s118 + $0x720] sm:$0xff] %vm764, %v679
        %994 = vst.msk [vmem:[%s118 + $0x728] sm:$0xff] %vm764, %v680
        %995 = vst.msk [vmem:[%s118 + $0x730] sm:$0xff] %vm764, %v681
        %996 = vst.msk [vmem:[%s118 + $0x738] sm:$0xff] %vm764, %v682
        %997 = vst.msk [vmem:[%s118 + $0x740] sm:$0xff] %vm764, %v683
        %998 = vst.msk [vmem:[%s118 + $0x748] sm:$0xff] %vm764, %v684
        %999 = vst.msk [vmem:[%s118 + $0x750] sm:$0xff] %vm764, %v685
        %1000 = vst.msk [vmem:[%s118 + $0x758] sm:$0xff] %vm764, %v686
        %1001 = vst.msk [vmem:[%s118 + $0x760] sm:$0xff] %vm764, %v687
        %1002 = vst.msk [vmem:[%s118 + $0x768] sm:$0xff] %vm764, %v688
        %1003 = vst.msk [vmem:[%s118 + $0x770] sm:$0xff] %vm764, %v689
        %1004 = vst.msk [vmem:[%s118 + $0x778] sm:$0xff] %vm764, %v690
        %1005 = vst.msk [vmem:[%s118 + $0x780] sm:$0xff] %vm764, %v691
        %1006 = vst.msk [vmem:[%s118 + $0x788] sm:$0xff] %vm764, %v692
        %1007 = vst.msk [vmem:[%s118 + $0x790] sm:$0xff] %vm764, %v693
        %1008 = vst.msk [vmem:[%s118 + $0x798] sm:$0xff] %vm764, %v694
        %1009 = vst.msk [vmem:[%s118 + $0x7a0] sm:$0xff] %vm764, %v695
        %1010 = vst.msk [vmem:[%s118 + $0x7a8] sm:$0xff] %vm764, %v696
        %1011 = vst.msk [vmem:[%s118 + $0x7b0] sm:$0xff] %vm764, %v697
        %1012 = vst.msk [vmem:[%s118 + $0x7b8] sm:$0xff] %vm764, %v698
        %1013 = vst.msk [vmem:[%s118 + $0x7c0] sm:$0xff] %vm764, %v699
        %1014 = vst.msk [vmem:[%s118 + $0x7c8] sm:$0xff] %vm764, %v700
        %1015 = vst.msk [vmem:[%s118 + $0x7d0] sm:$0xff] %vm764, %v701
        %1016 = vst.msk [vmem:[%s118 + $0x7d8] sm:$0xff] %vm764, %v702
        %1017 = vst.msk [vmem:[%s118 + $0x7e0] sm:$0xff] %vm764, %v703
        %1018 = vst.msk [vmem:[%s118 + $0x7e8] sm:$0xff] %vm764, %v704
        %1019 = vst.msk [vmem:[%s118 + $0x7f0] sm:$0xff] %vm764, %v705
        %1020 = vst.msk [vmem:[%s118 + $0x7f8] sm:$0xff] %vm764, %v706
        %1021 = vst.msk [vmem:[%s118 + $0x800] sm:$0xff] %vm764, %v707
        %1022 = vst.msk [vmem:[%s118 + $0x808] sm:$0xff] %vm764, %v708
        %1023 = vst.msk [vmem:[%s118 + $0x810] sm:$0xff] %vm764, %v709
        %1024 = vst.msk [vmem:[%s118 + $0x818] sm:$0xff] %vm764, %v710
        %1025 = vst.msk [vmem:[%s118 + $0x820] sm:$0xff] %vm764, %v711
        %1026 = vst.msk [vmem:[%s118 + $0x828] sm:$0xff] %vm764, %v712
        %1027 = vst.msk [vmem:[%s118 + $0x830] sm:$0xff] %vm764, %v713
        %1028 = vst.msk [vmem:[%s118 + $0x838] sm:$0xff] %vm764, %v714
        %1029 = vst.msk [vmem:[%s118 + $0x840] sm:$0xff] %vm764, %v715
        %1030 = vst.msk [vmem:[%s118 + $0x848] sm:$0xff] %vm764, %v716
        %1031 = vst.msk [vmem:[%s118 + $0x850] sm:$0xff] %vm764, %v717
        %1032 = vst.msk [vmem:[%s118 + $0x858] sm:$0xff] %vm764, %v718
        %1033 = vst.msk [vmem:[%s118 + $0x860] sm:$0xff] %vm764, %v719
        %1034 = vst.msk [vmem:[%s118 + $0x868] sm:$0xff] %vm764, %v720
        %1035 = vst.msk [vmem:[%s118 + $0x870] sm:$0xff] %vm764, %v721
        %1036 = vst.msk [vmem:[%s118 + $0x878] sm:$0xff] %vm764, %v722
        %1037 = vst.msk [vmem:[%s118 + $0x880] sm:$0xff] %vm764, %v723
        %1038 = vst.msk [vmem:[%s118 + $0x888] sm:$0xff] %vm764, %v724
        %1039 = vst.msk [vmem:[%s118 + $0x890] sm:$0xff] %vm764, %v725
        %1040 = vst.msk [vmem:[%s118 + $0x898] sm:$0xff] %vm764, %v726
        %1041 = vst.msk [vmem:[%s118 + $0x8a0] sm:$0xff] %vm764, %v727
        %1042 = vst.msk [vmem:[%s118 + $0x8a8] sm:$0xff] %vm764, %v728
        %1043 = vst.msk [vmem:[%s118 + $0x8b0] sm:$0xff] %vm764, %v729
        %1044 = vst.msk [vmem:[%s118 + $0x8b8] sm:$0xff] %vm764, %v730
        %1045 = vst.msk [vmem:[%s118 + $0x8c0] sm:$0xff] %vm764, %v731
        %1046 = vst.msk [vmem:[%s118 + $0x8c8] sm:$0xff] %vm764, %v732
        %1047 = vst.msk [vmem:[%s118 + $0x8d0] sm:$0xff] %vm764, %v733
        %1048 = vst.msk [vmem:[%s118 + $0x8d8] sm:$0xff] %vm764, %v734
        %1049 = vst.msk [vmem:[%s118 + $0x8e0] sm:$0xff] %vm764, %v735
        %1050 = vst.msk [vmem:[%s118 + $0x8e8] sm:$0xff] %vm764, %v736
        %1051 = vst.msk [vmem:[%s118 + $0x8f0] sm:$0xff] %vm764, %v737
        %1052 = vst.msk [vmem:[%s118 + $0x8f8] sm:$0xff] %vm764, %v738
        %1053 = vst.msk [vmem:[%s118 + $0x900] sm:$0xff] %vm764, %v739
        %1054 = vst.msk [vmem:[%s118 + $0x908] sm:$0xff] %vm764, %v740
        %1055 = vst.msk [vmem:[%s118 + $0x910] sm:$0xff] %vm764, %v741
        %1056 = vst.msk [vmem:[%s118 + $0x918] sm:$0xff] %vm764, %v742
        %1057 = vst.msk [vmem:[%s118 + $0x920] sm:$0xff] %vm764, %v743
        %1058 = vst.msk [vmem:[%s118 + $0x928] sm:$0xff] %vm764, %v744
        %1059 = vst.msk [vmem:[%s118 + $0x930] sm:$0xff] %vm764, %v745
        %1060 = vst.msk [vmem:[%s118 + $0x938] sm:$0xff] %vm764, %v746
        %1061 = vst.msk [vmem:[%s118 + $0x940] sm:$0xff] %vm764, %v747
        %1062 = vst.msk [vmem:[%s118 + $0x948] sm:$0xff] %vm764, %v748
        %1063 = vst.msk [vmem:[%s118 + $0x950] sm:$0xff] %vm764, %v749
        %1064 = vst.msk [vmem:[%s118 + $0x958] sm:$0xff] %vm764, %v750
        %1065 = vst.msk [vmem:[%s118 + $0x960] sm:$0xff] %vm764, %v751
        %1066 = vst.msk [vmem:[%s118 + $0x968] sm:$0xff] %vm764, %v752
        %1067 = vst.msk [vmem:[%s118 + $0x970] sm:$0xff] %vm764, %v753
        %1068 = vst.msk [vmem:[%s118 + $0x978] sm:$0xff] %vm764, %v754
        %1069 = vst.msk [vmem:[%s118 + $0x980] sm:$0xff] %vm764, %v755
        %1070 = vst.msk [vmem:[%s118 + $0x988] sm:$0xff] %vm764, %v756
        %1071 = vst.msk [vmem:[%s118 + $0x990] sm:$0xff] %vm764, %v757
        %1072 = vst.msk [vmem:[%s118 + $0x998] sm:$0xff] %vm764, %v758
        %1073 = vst.msk [vmem:[%s118 + $0x9a0] sm:$0xff] %vm764, %v759
        %1074 = vst.msk [vmem:[%s118 + $0x9a8] sm:$0xff] %vm764, %v760
        %1075 = vst.msk [vmem:[%s118 + $0x9b0] sm:$0xff] %vm764, %v761
        %1076 = vst.msk [vmem:[%s118 + $0x9b8] sm:$0xff] %vm764, %v762
        %1077 = vst.msk [vmem:[%s118 + $0x9c0] sm:$0xff] %vm764, %v763
        %s1078 = sand.u32 %s46, 1
        %s1079 = sand.u32 %s46, 1
        %s1080 = smul.addr %s1079, 2504
        %s1081 = scalar_lea.vmem [#allocation2], %s1080
        // Predicated region
        $region25: #{tpu_custom_call.1} parent=23 // pred_check
          %p1082 = pneg %p56
        $region26: #{tpu_custom_call.1} parent=23 // pred_check_branch
          %1084 = sbr.rel (%p1082) target = $region28
        $region27: #{tpu_custom_call.1} parent=23 // pred_region
          %s1085 = smul.u32 313, %s12
          %s1086 = ssub.s32 1250, %s1085
          %p1087 = scmp.lt.s32.totalorder %s1086, 313
          %s1088 = scalar_select %p1087, %s1086, 313
          %s1089 = smul.u32 128, %s1088
          %p1090 = scmp.ne.s32.totalorder 0, %s1089
          %s1091 = smul.addr %s1085, 8
          %s1092 = scalar_lea.vmem %s1, %s1091
          // Predicated region
          $region29: #{tpu_custom_call.1} parent=27 // pred_check
            %p1093 = pneg %p1090
          $region30: #{tpu_custom_call.1} parent=27 // pred_check_branch
            %1095 = sbr.rel (%p1093) target = $region32
          $region31: #{tpu_custom_call.1} parent=27 // pred_region
            // Predicated region
            $region33: #{tpu_custom_call.1} parent=31 // pred_check
              _
            $region34: #{tpu_custom_call.1} parent=31 // pred_check_branch
              %1097 = sbr.rel (0) target = $region36
            $region35: #{tpu_custom_call.1} parent=31 // pred_region
              // Predicated region
              $region55: #{tpu_custom_call.1} parent=35 // pred_check
                _
              $region56: #{tpu_custom_call.1} parent=35 // pred_check_branch
                %1273 = sbr.rel (0) target = $region58
              $region57: #{tpu_custom_call.1} parent=35 // pred_region
                %s1274 = sshrl.u32 %s1088, 6
                // While loop
                $region59: #{tpu_custom_call.1} parent=57 // loop_pre_header
                  _
                $region60: #{tpu_custom_call.1} parent=57 // loop_header
                  %s1276 = sphi 0, %s1278
                  %p1277 = scmp.ge.s32.totalorder %s1276, %s1274
                  %s1281 = sphi 0, %s1414
                  %s1282 = sphi %s1081, %s1417
                  %s1283 = sphi %s1092, %s1418
                $region61: #{tpu_custom_call.1} parent=57 // loop_header_branch
                  %1280 = sbr.rel (%p1277) target = $region65
                $region62: #{tpu_custom_call.1} parent=57 // loop_body
                  %v1284 = vld [vmem:[%s1282] sm:$0xff]
                  %1285 = vst [vmem:[%s1283] sm:$0xff] %v1284
                  %v1286 = vld [vmem:[%s1282 + $0x8] sm:$0xff]
                  %1287 = vst [vmem:[%s1283 + $0x8] sm:$0xff] %v1286
                  %v1288 = vld [vmem:[%s1282 + $0x10] sm:$0xff]
                  %1289 = vst [vmem:[%s1283 + $0x10] sm:$0xff] %v1288
                  %v1290 = vld [vmem:[%s1282 + $0x18] sm:$0xff]
                  %1291 = vst [vmem:[%s1283 + $0x18] sm:$0xff] %v1290
                  %v1292 = vld [vmem:[%s1282 + $0x20] sm:$0xff]
                  %1293 = vst [vmem:[%s1283 + $0x20] sm:$0xff] %v1292
                  %v1294 = vld [vmem:[%s1282 + $0x28] sm:$0xff]
                  %1295 = vst [vmem:[%s1283 + $0x28] sm:$0xff] %v1294
                  %v1296 = vld [vmem:[%s1282 + $0x30] sm:$0xff]
                  %1297 = vst [vmem:[%s1283 + $0x30] sm:$0xff] %v1296
                  %v1298 = vld [vmem:[%s1282 + $0x38] sm:$0xff]
                  %1299 = vst [vmem:[%s1283 + $0x38] sm:$0xff] %v1298
                  %v1300 = vld [vmem:[%s1282 + $0x40] sm:$0xff]
                  %1301 = vst [vmem:[%s1283 + $0x40] sm:$0xff] %v1300
                  %v1302 = vld [vmem:[%s1282 + $0x48] sm:$0xff]
                  %1303 = vst [vmem:[%s1283 + $0x48] sm:$0xff] %v1302
                  %v1304 = vld [vmem:[%s1282 + $0x50] sm:$0xff]
                  %1305 = vst [vmem:[%s1283 + $0x50] sm:$0xff] %v1304
                  %v1306 = vld [vmem:[%s1282 + $0x58] sm:$0xff]
                  %1307 = vst [vmem:[%s1283 + $0x58] sm:$0xff] %v1306
                  %v1308 = vld [vmem:[%s1282 + $0x60] sm:$0xff]
                  %1309 = vst [vmem:[%s1283 + $0x60] sm:$0xff] %v1308
                  %v1310 = vld [vmem:[%s1282 + $0x68] sm:$0xff]
                  %1311 = vst [vmem:[%s1283 + $0x68] sm:$0xff] %v1310
                  %v1312 = vld [vmem:[%s1282 + $0x70] sm:$0xff]
                  %1313 = vst [vmem:[%s1283 + $0x70] sm:$0xff] %v1312
                  %v1314 = vld [vmem:[%s1282 + $0x78] sm:$0xff]
                  %1315 = vst [vmem:[%s1283 + $0x78] sm:$0xff] %v1314
                  %v1316 = vld [vmem:[%s1282 + $0x80] sm:$0xff]
                  %1317 = vst [vmem:[%s1283 + $0x80] sm:$0xff] %v1316
                  %v1318 = vld [vmem:[%s1282 + $0x88] sm:$0xff]
                  %1319 = vst [vmem:[%s1283 + $0x88] sm:$0xff] %v1318
                  %v1320 = vld [vmem:[%s1282 + $0x90] sm:$0xff]
                  %1321 = vst [vmem:[%s1283 + $0x90] sm:$0xff] %v1320
                  %v1322 = vld [vmem:[%s1282 + $0x98] sm:$0xff]
                  %1323 = vst [vmem:[%s1283 + $0x98] sm:$0xff] %v1322
                  %v1324 = vld [vmem:[%s1282 + $0xa0] sm:$0xff]
                  %1325 = vst [vmem:[%s1283 + $0xa0] sm:$0xff] %v1324
                  %v1326 = vld [vmem:[%s1282 + $0xa8] sm:$0xff]
                  %1327 = vst [vmem:[%s1283 + $0xa8] sm:$0xff] %v1326
                  %v1328 = vld [vmem:[%s1282 + $0xb0] sm:$0xff]
                  %1329 = vst [vmem:[%s1283 + $0xb0] sm:$0xff] %v1328
                  %v1330 = vld [vmem:[%s1282 + $0xb8] sm:$0xff]
                  %1331 = vst [vmem:[%s1283 + $0xb8] sm:$0xff] %v1330
                  %v1332 = vld [vmem:[%s1282 + $0xc0] sm:$0xff]
                  %1333 = vst [vmem:[%s1283 + $0xc0] sm:$0xff] %v1332
                  %v1334 = vld [vmem:[%s1282 + $0xc8] sm:$0xff]
                  %1335 = vst [vmem:[%s1283 + $0xc8] sm:$0xff] %v1334
                  %v1336 = vld [vmem:[%s1282 + $0xd0] sm:$0xff]
                  %1337 = vst [vmem:[%s1283 + $0xd0] sm:$0xff] %v1336
                  %v1338 = vld [vmem:[%s1282 + $0xd8] sm:$0xff]
                  %1339 = vst [vmem:[%s1283 + $0xd8] sm:$0xff] %v1338
                  %v1340 = vld [vmem:[%s1282 + $0xe0] sm:$0xff]
                  %1341 = vst [vmem:[%s1283 + $0xe0] sm:$0xff] %v1340
                  %v1342 = vld [vmem:[%s1282 + $0xe8] sm:$0xff]
                  %1343 = vst [vmem:[%s1283 + $0xe8] sm:$0xff] %v1342
                  %v1344 = vld [vmem:[%s1282 + $0xf0] sm:$0xff]
                  %1345 = vst [vmem:[%s1283 + $0xf0] sm:$0xff] %v1344
                  %v1346 = vld [vmem:[%s1282 + $0xf8] sm:$0xff]
                  %1347 = vst [vmem:[%s1283 + $0xf8] sm:$0xff] %v1346
                  %v1348 = vld [vmem:[%s1282 + $0x100] sm:$0xff]
                  %1349 = vst [vmem:[%s1283 + $0x100] sm:$0xff] %v1348
                  %v1350 = vld [vmem:[%s1282 + $0x108] sm:$0xff]
                  %1351 = vst [vmem:[%s1283 + $0x108] sm:$0xff] %v1350
                  %v1352 = vld [vmem:[%s1282 + $0x110] sm:$0xff]
                  %1353 = vst [vmem:[%s1283 + $0x110] sm:$0xff] %v1352
                  %v1354 = vld [vmem:[%s1282 + $0x118] sm:$0xff]
                  %1355 = vst [vmem:[%s1283 + $0x118] sm:$0xff] %v1354
                  %v1356 = vld [vmem:[%s1282 + $0x120] sm:$0xff]
                  %1357 = vst [vmem:[%s1283 + $0x120] sm:$0xff] %v1356
                  %v1358 = vld [vmem:[%s1282 + $0x128] sm:$0xff]
                  %1359 = vst [vmem:[%s1283 + $0x128] sm:$0xff] %v1358
                  %v1360 = vld [vmem:[%s1282 + $0x130] sm:$0xff]
                  %1361 = vst [vmem:[%s1283 + $0x130] sm:$0xff] %v1360
                  %v1362 = vld [vmem:[%s1282 + $0x138] sm:$0xff]
                  %1363 = vst [vmem:[%s1283 + $0x138] sm:$0xff] %v1362
                  %v1364 = vld [vmem:[%s1282 + $0x140] sm:$0xff]
                  %1365 = vst [vmem:[%s1283 + $0x140] sm:$0xff] %v1364
                  %v1366 = vld [vmem:[%s1282 + $0x148] sm:$0xff]
                  %1367 = vst [vmem:[%s1283 + $0x148] sm:$0xff] %v1366
                  %v1368 = vld [vmem:[%s1282 + $0x150] sm:$0xff]
                  %1369 = vst [vmem:[%s1283 + $0x150] sm:$0xff] %v1368
                  %v1370 = vld [vmem:[%s1282 + $0x158] sm:$0xff]
                  %1371 = vst [vmem:[%s1283 + $0x158] sm:$0xff] %v1370
                  %v1372 = vld [vmem:[%s1282 + $0x160] sm:$0xff]
                  %1373 = vst [vmem:[%s1283 + $0x160] sm:$0xff] %v1372
                  %v1374 = vld [vmem:[%s1282 + $0x168] sm:$0xff]
                  %1375 = vst [vmem:[%s1283 + $0x168] sm:$0xff] %v1374
                  %v1376 = vld [vmem:[%s1282 + $0x170] sm:$0xff]
                  %1377 = vst [vmem:[%s1283 + $0x170] sm:$0xff] %v1376
                  %v1378 = vld [vmem:[%s1282 + $0x178] sm:$0xff]
                  %1379 = vst [vmem:[%s1283 + $0x178] sm:$0xff] %v1378
                  %v1380 = vld [vmem:[%s1282 + $0x180] sm:$0xff]
                  %1381 = vst [vmem:[%s1283 + $0x180] sm:$0xff] %v1380
                  %v1382 = vld [vmem:[%s1282 + $0x188] sm:$0xff]
                  %1383 = vst [vmem:[%s1283 + $0x188] sm:$0xff] %v1382
                  %v1384 = vld [vmem:[%s1282 + $0x190] sm:$0xff]
                  %1385 = vst [vmem:[%s1283 + $0x190] sm:$0xff] %v1384
                  %v1386 = vld [vmem:[%s1282 + $0x198] sm:$0xff]
                  %1387 = vst [vmem:[%s1283 + $0x198] sm:$0xff] %v1386
                  %v1388 = vld [vmem:[%s1282 + $0x1a0] sm:$0xff]
                  %1389 = vst [vmem:[%s1283 + $0x1a0] sm:$0xff] %v1388
                  %v1390 = vld [vmem:[%s1282 + $0x1a8] sm:$0xff]
                  %1391 = vst [vmem:[%s1283 + $0x1a8] sm:$0xff] %v1390
                  %v1392 = vld [vmem:[%s1282 + $0x1b0] sm:$0xff]
                  %1393 = vst [vmem:[%s1283 + $0x1b0] sm:$0xff] %v1392
                  %v1394 = vld [vmem:[%s1282 + $0x1b8] sm:$0xff]
                  %1395 = vst [vmem:[%s1283 + $0x1b8] sm:$0xff] %v1394
                  %v1396 = vld [vmem:[%s1282 + $0x1c0] sm:$0xff]
                  %1397 = vst [vmem:[%s1283 + $0x1c0] sm:$0xff] %v1396
                  %v1398 = vld [vmem:[%s1282 + $0x1c8] sm:$0xff]
                  %1399 = vst [vmem:[%s1283 + $0x1c8] sm:$0xff] %v1398
                  %v1400 = vld [vmem:[%s1282 + $0x1d0] sm:$0xff]
                  %1401 = vst [vmem:[%s1283 + $0x1d0] sm:$0xff] %v1400
                  %v1402 = vld [vmem:[%s1282 + $0x1d8] sm:$0xff]
                  %1403 = vst [vmem:[%s1283 + $0x1d8] sm:$0xff] %v1402
                  %v1404 = vld [vmem:[%s1282 + $0x1e0] sm:$0xff]
                  %1405 = vst [vmem:[%s1283 + $0x1e0] sm:$0xff] %v1404
                  %v1406 = vld [vmem:[%s1282 + $0x1e8] sm:$0xff]
                  %1407 = vst [vmem:[%s1283 + $0x1e8] sm:$0xff] %v1406
                  %v1408 = vld [vmem:[%s1282 + $0x1f0] sm:$0xff]
                  %1409 = vst [vmem:[%s1283 + $0x1f0] sm:$0xff] %v1408
                  %v1410 = vld [vmem:[%s1282 + $0x1f8] sm:$0xff]
                  %1411 = vst [vmem:[%s1283 + $0x1f8] sm:$0xff] %v1410
                  %s1412 = sadd.s32 1, %s1281
                  %p1413 = scmp.ge.s32.totalorder %s1412, %s1274
                  %s1414 = scalar_select %p1413, 0, %s1412
                  %s1415 = smul.u32 %s1414, 512
                  %s1416 = smul.u32 %s1414, 512
                  %s1417 = scalar_lea.vmem %s1081, %s1415 [#allocation2]
                  %s1418 = scalar_lea.vmem %s1092, %s1416
                $region63: #{tpu_custom_call.1} parent=57 // loop_footer
                  %s1278 = sadd.s32 %s1276, 1
                $region64: #{tpu_custom_call.1} parent=57 // loop_footer_branch
                  %1275 = sbr.rel target = $region60
                $region65: #{tpu_custom_call.1} parent=57 // loop_exit
                  _
                %s1419 = sshrl.u32 %s1088, 6
                %s1420 = sand.u32 %s1088, 63
                %s1421 = smul.u32 %s1419, 64
                %s1422 = smul.u32 8, %s1421
                %s1423 = scalar_lea.vmem %s1081, %s1422 [#allocation2]
                %s1424 = smul.u32 8, %s1421
                %s1425 = scalar_lea.vmem %s1092, %s1424
                // While loop
                $region66: #{tpu_custom_call.1} parent=57 // loop_pre_header
                  _
                $region67: #{tpu_custom_call.1} parent=57 // loop_header
                  %s1427 = sphi 0, %s1429
                  %p1428 = scmp.ge.s32.totalorder %s1427, %s1420
                  %s1432 = sphi 0, %s1439
                  %s1433 = sphi %s1423, %s1442
                  %s1434 = sphi %s1425, %s1443
                $region68: #{tpu_custom_call.1} parent=57 // loop_header_branch
                  %1431 = sbr.rel (%p1428) target = $region72
                $region69: #{tpu_custom_call.1} parent=57 // loop_body
                  %v1435 = vld [vmem:[%s1433] sm:$0xff]
                  %1436 = vst [vmem:[%s1434] sm:$0xff] %v1435
                  %s1437 = sadd.s32 1, %s1432
                  %p1438 = scmp.ge.s32.totalorder %s1437, %s1420
                  %s1439 = scalar_select %p1438, 0, %s1437
                  %s1440 = smul.u32 %s1439, 8
                  %s1441 = smul.u32 %s1439, 8
                  %s1442 = scalar_lea.vmem %s1423, %s1440 [#allocation2]
                  %s1443 = scalar_lea.vmem %s1425, %s1441
                $region70: #{tpu_custom_call.1} parent=57 // loop_footer
                  %s1429 = sadd.s32 %s1427, 1
                $region71: #{tpu_custom_call.1} parent=57 // loop_footer_branch
                  %1426 = sbr.rel target = $region67
                $region72: #{tpu_custom_call.1} parent=57 // loop_exit
                  _
              $region58: #{tpu_custom_call.1} parent=35 // pred_fallthru
                _
              // Predicated region
              $region73: #{tpu_custom_call.1} parent=35 // pred_check
                _
              $region74: #{tpu_custom_call.1} parent=35 // pred_check_branch
                %1445 = sbr.rel target = $region76
              $region75: #{tpu_custom_call.1} parent=35 // pred_region
                _
              $region76: #{tpu_custom_call.1} parent=35 // pred_fallthru
                _
            $region36: #{tpu_custom_call.1} parent=31 // pred_fallthru
              _
            // Predicated region
            $region37: #{tpu_custom_call.1} parent=31 // pred_check
              _
            $region38: #{tpu_custom_call.1} parent=31 // pred_check_branch
              %1099 = sbr.rel target = $region40
            $region39: #{tpu_custom_call.1} parent=31 // pred_region
              %s1101 = ssub.s32 256, 1
              %s1102 = sshrl.u32 %s1088, 6
              // While loop
              $region41: #{tpu_custom_call.1} parent=39 // loop_pre_header
                _
              $region42: #{tpu_custom_call.1} parent=39 // loop_header
                %s1104 = sphi 0, %s1106
                %p1105 = scmp.ge.s32.totalorder %s1104, %s1102
                %s1109 = sphi 0, %s1242
                %s1110 = sphi %s1081, %s1245
                %s1111 = sphi %s1092, %s1246
              $region43: #{tpu_custom_call.1} parent=39 // loop_header_branch
                %1108 = sbr.rel (%p1105) target = $region47
              $region44: #{tpu_custom_call.1} parent=39 // loop_body
                %v1112 = vld [vmem:[%s1110] sm:%s1101]
                %1113 = vst [vmem:[%s1111] sm:%s1101] %v1112
                %v1114 = vld [vmem:[%s1110 + $0x8] sm:%s1101]
                %1115 = vst [vmem:[%s1111 + $0x8] sm:%s1101] %v1114
                %v1116 = vld [vmem:[%s1110 + $0x10] sm:%s1101]
                %1117 = vst [vmem:[%s1111 + $0x10] sm:%s1101] %v1116
                %v1118 = vld [vmem:[%s1110 + $0x18] sm:%s1101]
                %1119 = vst [vmem:[%s1111 + $0x18] sm:%s1101] %v1118
                %v1120 = vld [vmem:[%s1110 + $0x20] sm:%s1101]
                %1121 = vst [vmem:[%s1111 + $0x20] sm:%s1101] %v1120
                %v1122 = vld [vmem:[%s1110 + $0x28] sm:%s1101]
                %1123 = vst [vmem:[%s1111 + $0x28] sm:%s1101] %v1122
                %v1124 = vld [vmem:[%s1110 + $0x30] sm:%s1101]
                %1125 = vst [vmem:[%s1111 + $0x30] sm:%s1101] %v1124
                %v1126 = vld [vmem:[%s1110 + $0x38] sm:%s1101]
                %1127 = vst [vmem:[%s1111 + $0x38] sm:%s1101] %v1126
                %v1128 = vld [vmem:[%s1110 + $0x40] sm:%s1101]
                %1129 = vst [vmem:[%s1111 + $0x40] sm:%s1101] %v1128
                %v1130 = vld [vmem:[%s1110 + $0x48] sm:%s1101]
                %1131 = vst [vmem:[%s1111 + $0x48] sm:%s1101] %v1130
                %v1132 = vld [vmem:[%s1110 + $0x50] sm:%s1101]
                %1133 = vst [vmem:[%s1111 + $0x50] sm:%s1101] %v1132
                %v1134 = vld [vmem:[%s1110 + $0x58] sm:%s1101]
                %1135 = vst [vmem:[%s1111 + $0x58] sm:%s1101] %v1134
                %v1136 = vld [vmem:[%s1110 + $0x60] sm:%s1101]
                %1137 = vst [vmem:[%s1111 + $0x60] sm:%s1101] %v1136
                %v1138 = vld [vmem:[%s1110 + $0x68] sm:%s1101]
                %1139 = vst [vmem:[%s1111 + $0x68] sm:%s1101] %v1138
                %v1140 = vld [vmem:[%s1110 + $0x70] sm:%s1101]
                %1141 = vst [vmem:[%s1111 + $0x70] sm:%s1101] %v1140
                %v1142 = vld [vmem:[%s1110 + $0x78] sm:%s1101]
                %1143 = vst [vmem:[%s1111 + $0x78] sm:%s1101] %v1142
                %v1144 = vld [vmem:[%s1110 + $0x80] sm:%s1101]
                %1145 = vst [vmem:[%s1111 + $0x80] sm:%s1101] %v1144
                %v1146 = vld [vmem:[%s1110 + $0x88] sm:%s1101]
                %1147 = vst [vmem:[%s1111 + $0x88] sm:%s1101] %v1146
                %v1148 = vld [vmem:[%s1110 + $0x90] sm:%s1101]
                %1149 = vst [vmem:[%s1111 + $0x90] sm:%s1101] %v1148
                %v1150 = vld [vmem:[%s1110 + $0x98] sm:%s1101]
                %1151 = vst [vmem:[%s1111 + $0x98] sm:%s1101] %v1150
                %v1152 = vld [vmem:[%s1110 + $0xa0] sm:%s1101]
                %1153 = vst [vmem:[%s1111 + $0xa0] sm:%s1101] %v1152
                %v1154 = vld [vmem:[%s1110 + $0xa8] sm:%s1101]
                %1155 = vst [vmem:[%s1111 + $0xa8] sm:%s1101] %v1154
                %v1156 = vld [vmem:[%s1110 + $0xb0] sm:%s1101]
                %1157 = vst [vmem:[%s1111 + $0xb0] sm:%s1101] %v1156
                %v1158 = vld [vmem:[%s1110 + $0xb8] sm:%s1101]
                %1159 = vst [vmem:[%s1111 + $0xb8] sm:%s1101] %v1158
                %v1160 = vld [vmem:[%s1110 + $0xc0] sm:%s1101]
                %1161 = vst [vmem:[%s1111 + $0xc0] sm:%s1101] %v1160
                %v1162 = vld [vmem:[%s1110 + $0xc8] sm:%s1101]
                %1163 = vst [vmem:[%s1111 + $0xc8] sm:%s1101] %v1162
                %v1164 = vld [vmem:[%s1110 + $0xd0] sm:%s1101]
                %1165 = vst [vmem:[%s1111 + $0xd0] sm:%s1101] %v1164
                %v1166 = vld [vmem:[%s1110 + $0xd8] sm:%s1101]
                %1167 = vst [vmem:[%s1111 + $0xd8] sm:%s1101] %v1166
                %v1168 = vld [vmem:[%s1110 + $0xe0] sm:%s1101]
                %1169 = vst [vmem:[%s1111 + $0xe0] sm:%s1101] %v1168
                %v1170 = vld [vmem:[%s1110 + $0xe8] sm:%s1101]
                %1171 = vst [vmem:[%s1111 + $0xe8] sm:%s1101] %v1170
                %v1172 = vld [vmem:[%s1110 + $0xf0] sm:%s1101]
                %1173 = vst [vmem:[%s1111 + $0xf0] sm:%s1101] %v1172
                %v1174 = vld [vmem:[%s1110 + $0xf8] sm:%s1101]
                %1175 = vst [vmem:[%s1111 + $0xf8] sm:%s1101] %v1174
                %v1176 = vld [vmem:[%s1110 + $0x100] sm:%s1101]
                %1177 = vst [vmem:[%s1111 + $0x100] sm:%s1101] %v1176
                %v1178 = vld [vmem:[%s1110 + $0x108] sm:%s1101]
                %1179 = vst [vmem:[%s1111 + $0x108] sm:%s1101] %v1178
                %v1180 = vld [vmem:[%s1110 + $0x110] sm:%s1101]
                %1181 = vst [vmem:[%s1111 + $0x110] sm:%s1101] %v1180
                %v1182 = vld [vmem:[%s1110 + $0x118] sm:%s1101]
                %1183 = vst [vmem:[%s1111 + $0x118] sm:%s1101] %v1182
                %v1184 = vld [vmem:[%s1110 + $0x120] sm:%s1101]
                %1185 = vst [vmem:[%s1111 + $0x120] sm:%s1101] %v1184
                %v1186 = vld [vmem:[%s1110 + $0x128] sm:%s1101]
                %1187 = vst [vmem:[%s1111 + $0x128] sm:%s1101] %v1186
                %v1188 = vld [vmem:[%s1110 + $0x130] sm:%s1101]
                %1189 = vst [vmem:[%s1111 + $0x130] sm:%s1101] %v1188
                %v1190 = vld [vmem:[%s1110 + $0x138] sm:%s1101]
                %1191 = vst [vmem:[%s1111 + $0x138] sm:%s1101] %v1190
                %v1192 = vld [vmem:[%s1110 + $0x140] sm:%s1101]
                %1193 = vst [vmem:[%s1111 + $0x140] sm:%s1101] %v1192
                %v1194 = vld [vmem:[%s1110 + $0x148] sm:%s1101]
                %1195 = vst [vmem:[%s1111 + $0x148] sm:%s1101] %v1194
                %v1196 = vld [vmem:[%s1110 + $0x150] sm:%s1101]
                %1197 = vst [vmem:[%s1111 + $0x150] sm:%s1101] %v1196
                %v1198 = vld [vmem:[%s1110 + $0x158] sm:%s1101]
                %1199 = vst [vmem:[%s1111 + $0x158] sm:%s1101] %v1198
                %v1200 = vld [vmem:[%s1110 + $0x160] sm:%s1101]
                %1201 = vst [vmem:[%s1111 + $0x160] sm:%s1101] %v1200
                %v1202 = vld [vmem:[%s1110 + $0x168] sm:%s1101]
                %1203 = vst [vmem:[%s1111 + $0x168] sm:%s1101] %v1202
                %v1204 = vld [vmem:[%s1110 + $0x170] sm:%s1101]
                %1205 = vst [vmem:[%s1111 + $0x170] sm:%s1101] %v1204
                %v1206 = vld [vmem:[%s1110 + $0x178] sm:%s1101]
                %1207 = vst [vmem:[%s1111 + $0x178] sm:%s1101] %v1206
                %v1208 = vld [vmem:[%s1110 + $0x180] sm:%s1101]
                %1209 = vst [vmem:[%s1111 + $0x180] sm:%s1101] %v1208
                %v1210 = vld [vmem:[%s1110 + $0x188] sm:%s1101]
                %1211 = vst [vmem:[%s1111 + $0x188] sm:%s1101] %v1210
                %v1212 = vld [vmem:[%s1110 + $0x190] sm:%s1101]
                %1213 = vst [vmem:[%s1111 + $0x190] sm:%s1101] %v1212
                %v1214 = vld [vmem:[%s1110 + $0x198] sm:%s1101]
                %1215 = vst [vmem:[%s1111 + $0x198] sm:%s1101] %v1214
                %v1216 = vld [vmem:[%s1110 + $0x1a0] sm:%s1101]
                %1217 = vst [vmem:[%s1111 + $0x1a0] sm:%s1101] %v1216
                %v1218 = vld [vmem:[%s1110 + $0x1a8] sm:%s1101]
                %1219 = vst [vmem:[%s1111 + $0x1a8] sm:%s1101] %v1218
                %v1220 = vld [vmem:[%s1110 + $0x1b0] sm:%s1101]
                %1221 = vst [vmem:[%s1111 + $0x1b0] sm:%s1101] %v1220
                %v1222 = vld [vmem:[%s1110 + $0x1b8] sm:%s1101]
                %1223 = vst [vmem:[%s1111 + $0x1b8] sm:%s1101] %v1222
                %v1224 = vld [vmem:[%s1110 + $0x1c0] sm:%s1101]
                %1225 = vst [vmem:[%s1111 + $0x1c0] sm:%s1101] %v1224
                %v1226 = vld [vmem:[%s1110 + $0x1c8] sm:%s1101]
                %1227 = vst [vmem:[%s1111 + $0x1c8] sm:%s1101] %v1226
                %v1228 = vld [vmem:[%s1110 + $0x1d0] sm:%s1101]
                %1229 = vst [vmem:[%s1111 + $0x1d0] sm:%s1101] %v1228
                %v1230 = vld [vmem:[%s1110 + $0x1d8] sm:%s1101]
                %1231 = vst [vmem:[%s1111 + $0x1d8] sm:%s1101] %v1230
                %v1232 = vld [vmem:[%s1110 + $0x1e0] sm:%s1101]
                %1233 = vst [vmem:[%s1111 + $0x1e0] sm:%s1101] %v1232
                %v1234 = vld [vmem:[%s1110 + $0x1e8] sm:%s1101]
                %1235 = vst [vmem:[%s1111 + $0x1e8] sm:%s1101] %v1234
                %v1236 = vld [vmem:[%s1110 + $0x1f0] sm:%s1101]
                %1237 = vst [vmem:[%s1111 + $0x1f0] sm:%s1101] %v1236
                %v1238 = vld [vmem:[%s1110 + $0x1f8] sm:%s1101]
                %1239 = vst [vmem:[%s1111 + $0x1f8] sm:%s1101] %v1238
                %s1240 = sadd.s32 1, %s1109
                %p1241 = scmp.ge.s32.totalorder %s1240, %s1102
                %s1242 = scalar_select %p1241, 0, %s1240
                %s1243 = smul.u32 %s1242, 512
                %s1244 = smul.u32 %s1242, 512
                %s1245 = scalar_lea.vmem %s1081, %s1243 [#allocation2]
                %s1246 = scalar_lea.vmem %s1092, %s1244
              $region45: #{tpu_custom_call.1} parent=39 // loop_footer
                %s1106 = sadd.s32 %s1104, 1
              $region46: #{tpu_custom_call.1} parent=39 // loop_footer_branch
                %1103 = sbr.rel target = $region42
              $region47: #{tpu_custom_call.1} parent=39 // loop_exit
                _
              %s1247 = sshrl.u32 %s1088, 6
              %s1248 = sand.u32 %s1088, 63
              %s1249 = smul.u32 %s1247, 64
              %s1250 = smul.u32 8, %s1249
              %s1251 = scalar_lea.vmem %s1081, %s1250 [#allocation2]
              %s1252 = smul.u32 8, %s1249
              %s1253 = scalar_lea.vmem %s1092, %s1252
              // While loop
              $region48: #{tpu_custom_call.1} parent=39 // loop_pre_header
                _
              $region49: #{tpu_custom_call.1} parent=39 // loop_header
                %s1255 = sphi 0, %s1257
                %p1256 = scmp.ge.s32.totalorder %s1255, %s1248
                %s1260 = sphi 0, %s1267
                %s1261 = sphi %s1251, %s1270
                %s1262 = sphi %s1253, %s1271
              $region50: #{tpu_custom_call.1} parent=39 // loop_header_branch
                %1259 = sbr.rel (%p1256) target = $region54
              $region51: #{tpu_custom_call.1} parent=39 // loop_body
                %v1263 = vld [vmem:[%s1261] sm:%s1101]
                %1264 = vst [vmem:[%s1262] sm:%s1101] %v1263
                %s1265 = sadd.s32 1, %s1260
                %p1266 = scmp.ge.s32.totalorder %s1265, %s1248
                %s1267 = scalar_select %p1266, 0, %s1265
                %s1268 = smul.u32 %s1267, 8
                %s1269 = smul.u32 %s1267, 8
                %s1270 = scalar_lea.vmem %s1251, %s1268 [#allocation2]
                %s1271 = scalar_lea.vmem %s1253, %s1269
              $region52: #{tpu_custom_call.1} parent=39 // loop_footer
                %s1257 = sadd.s32 %s1255, 1
              $region53: #{tpu_custom_call.1} parent=39 // loop_footer_branch
                %1254 = sbr.rel target = $region49
              $region54: #{tpu_custom_call.1} parent=39 // loop_exit
                _
            $region40: #{tpu_custom_call.1} parent=31 // pred_fallthru
              _
          $region32: #{tpu_custom_call.1} parent=27 // pred_fallthru
            _
          %1446 = vnop
        $region28: #{tpu_custom_call.1} parent=23 // pred_fallthru
          _
      $region24: #{tpu_custom_call.1} parent=5 // pred_fallthru
        _
      %p1447 = scmp.le.s32.totalorder 2, %s7
      // Predicated region
      $region77: #{tpu_custom_call.1} parent=5 // pred_check
        %p1448 = pneg %p1447
      $region78: #{tpu_custom_call.1} parent=5 // pred_check_branch
        %1450 = sbr.rel (%p1448) target = $region80
      $region79: #{tpu_custom_call.1} parent=5 // pred_region
        %s1451 = ssub.s32 %s7, 2
        // Predicated region
        $region81: #{tpu_custom_call.1} parent=79 // pred_check
          %p1452 = pneg %p62
        $region82: #{tpu_custom_call.1} parent=79 // pred_check_branch
          %1454 = sbr.rel (%p1452) target = $region84
        $region83: #{tpu_custom_call.1} parent=79 // pred_region
          %s1455 = sand.u32 %s47, 1
          %s1456 = sand.u32 %s47, 1
          %s1457 = smul.addr %s1456, 2504
          %s1458 = scalar_lea.vmem [#allocation2], %s1457
        $region84: #{tpu_custom_call.1} parent=79 // pred_fallthru
          _
      $region80: #{tpu_custom_call.1} parent=5 // pred_fallthru
        _
    $region6: #{tpu_custom_call.1} parent=1 // loop_footer
      %s11 = sadd.s32 1, %s7
    $region7: #{tpu_custom_call.1} parent=1 // loop_footer_branch
      %6 = sbr.rel target = $region3
    $region8: #{tpu_custom_call.1} parent=1 // loop_exit
      _

</llo_original>
